<compile_context>
chip_gen: v6e
topology: v6e:2x2x1
jax: 0.10.0
libtpu: 0.0.40
codegen_flags: <defaults>
</compile_context>

<pallas_src>
import functools

import numpy as np
import jax
import jax.numpy as jnp
from jax import lax
from jax.experimental import pallas as pl
from jax.experimental.pallas import tpu as pltpu


def _fused_rnn_kernel(x_ref, h0_ref, wih_t_ref, whh_t_ref, b_ref,
                      wout_t_ref, bout_ref,
                      lp_ref, hN_ref,
                      h_scr, hall_scr,
                      *, seq_len, t_blk, tail_mask):
    """One time block: serial tanh-RNN recurrence + fused projection/log_softmax.

    x_ref     : (t_blk*Bp, Ip) bf16  flattened time-major padded inputs (row = t*Bp + b)
    h0_ref    : (Bp, Hp) f32         initial hidden state
    wih_t_ref : (Ip, Hp) bf16        W_ih^T
    whh_t_ref : (Hp, Hp) f32         W_hh^T
    b_ref     : (1, Hp) f32          b_ih + b_hh
    wout_t_ref: (Hp, Op) bf16        W_out^T / Temperature
    bout_ref  : (1, Op) f32          b_out (padded cols = -1e30)
    lp_ref    : (t_blk*Bp, Op) f32   log_softmax(logits) output block
    hN_ref    : (Bp, Hp) f32         final hidden state (written on last block)
    h_scr     : (Bp, Hp) f32         hidden state carried across grid blocks
    hall_scr  : (t_blk*Bp, Hp) f32   per-block h_t staging (VMEM only, never HBM)
    """
    Bp = h0_ref.shape[0]
    blk = pl.program_id(0)

    # TODO(synk): nn.Dropout(p=0.5) on `hidden` is stochastic in train mode; we
    # reproduce eval-mode (identity) dropout here.
    @pl.when(blk == 0)
    def _():
        h_scr[...] = h0_ref[...]

    # Off the serial chain: input projection for the whole time block as one
    # (t_blk*Bp, Ip) x (Ip, Hp) bf16 matmul with f32 accumulation, staged into
    # the VMEM scratch that is then overwritten in place with h_t.
    xw = jnp.dot(x_ref[...], wih_t_ref[...],
                 preferred_element_type=jnp.float32) + b_ref[...]
    hall_scr[...] = xw

    # Serial recurrence: only the (Bp,Hp)x(Hp,Hp) matmul + tanh sits on the
    # critical path.  W_hh^T is re-read from VMEM each (unrolled) step so the
    # full weight tile is never pinned in vregs across the unrolled body.
    # TODO(synk): a weight-stationary MXU path (pltpu.matmul_push_rhs /
    # matmul_acc_lhs / matmul_pop, RHS held across the block) would avoid
    # re-pushing W_hh^T every step; kept on jnp.dot for portable lowering.
    def step(t, h):
        off = pl.multiple_of(t * Bp, Bp)
        pre = hall_scr[pl.ds(off, Bp), :] + jnp.dot(
            h, whh_t_ref[...], preferred_element_type=jnp.float32)
        h_new = jnp.tanh(pre)
        if tail_mask:
            # Freeze the hidden state past the true sequence end so the
            # returned final hidden is the one at t = seq_len - 1.
            h_new = jnp.where(blk * t_blk + t < seq_len, h_new, h)
        hall_scr[pl.ds(off, Bp), :] = h_new
        return h_new

    h_last = lax.fori_loop(0, t_blk, step, h_scr[...], unroll=True)
    h_scr[...] = h_last

    @pl.when(blk == pl.num_programs(0) - 1)
    def _():
        hN_ref[...] = h_last

    # Fused epilogue (replaces the former second pallas_call): logits =
    # h_blk @ (W_out^T / T) + b_out, then log_softmax over the lane dim.
    h_blk = hall_scr[...].astype(wout_t_ref.dtype)
    logits = jnp.dot(h_blk, wout_t_ref[...],
                     preferred_element_type=jnp.float32) + bout_ref[...]
    m = jnp.max(logits, axis=-1, keepdims=True)
    lse = jnp.log(jnp.sum(jnp.exp(logits - m), axis=-1, keepdims=True)) + m
    lp_ref[...] = (logits - lse).astype(lp_ref.dtype)


def _round_up(x, m):
    return ((x + m - 1) // m) * m


def rnn_composer_forward(inputs, hidden, temperature, params):
    """inputs: (B, S, I)  hidden: (1, B, H) -> (log_probs (B, S, O), hidden (1, B, H))."""
    w_ih, w_hh, b_ih, b_hh, w_out, b_out = params
    B, S, I = inputs.shape
    H = w_hh.shape[0]
    O = w_out.shape[0]

    f32 = jnp.float32
    bf16 = jnp.bfloat16
    Bp = _round_up(B, 8)       # sublane padding
    Ip = _round_up(I, 128)     # lane padding
    Hp = _round_up(H, 128)
    Op = _round_up(O, 128)

    # Fixed time-block size (cap 64); pad S up to a multiple of t_blk and mask
    # the tail inside the kernel.  (Previously a largest-divisor heuristic that
    # could degenerate to one timestep per grid step for prime S.)
    t_blk = min(64, _round_up(S, 8))
    Sp = _round_up(S, t_blk)
    n_blk = Sp // t_blk
    rows_per_blk = t_blk * Bp

    # Seq-major, padded, flattened inputs: row r = t*Bp + b.  The transpose/pad
    # stays in the XLA wrapper; for very long sequences it could be folded into
    # the kernel pipeline with an in-kernel XLU transpose.
    x = jnp.transpose(inputs, (1, 0, 2)).astype(f32)                  # (S, B, I)
    x = jnp.pad(x, ((0, Sp - S), (0, Bp - B), (0, Ip - I)))           # (Sp, Bp, Ip)
    x = x.reshape(Sp * Bp, Ip).astype(bf16)

    h0 = jnp.pad(hidden[0].astype(f32), ((0, Bp - B), (0, Hp - H)))   # (Bp, Hp)

    wih_t = jnp.pad(jnp.transpose(w_ih).astype(f32),
                    ((0, Ip - I), (0, Hp - H))).astype(bf16)
    whh_t = jnp.pad(jnp.transpose(w_hh).astype(f32), ((0, Hp - H), (0, Hp - H)))
    b = jnp.pad((b_ih + b_hh).astype(f32), (0, Hp - H)).reshape(1, Hp)

    # Fold 1/Temperature into the output projection weights (trace-time).
    wout_t = jnp.pad((jnp.transpose(w_out) / temperature).astype(f32),
                     ((0, Hp - H), (0, Op - O))).astype(bf16)
    # Padded logit columns get a very negative bias so exp() underflows to 0.
    bout = jnp.pad(b_out.astype(f32), (0, Op - O),
                   constant_values=-1e30).reshape(1, Op)

    kernel = functools.partial(
        _fused_rnn_kernel, seq_len=S, t_blk=t_blk, tail_mask=(Sp != S))

    log_probs_flat, h_final = pl.pallas_call(
        kernel,
        out_shape=(
            jax.ShapeDtypeStruct((Sp * Bp, Op), f32),
            jax.ShapeDtypeStruct((Bp, Hp), f32),
        ),
        grid_spec=pltpu.PrefetchScalarGridSpec(
            num_scalar_prefetch=0,
            grid=(n_blk,),
            in_specs=[
                pl.BlockSpec((rows_per_blk, Ip), lambda i: (i, 0)),    # x (bf16)
                pl.BlockSpec((Bp, Hp), lambda i: (0, 0)),              # h0
                pl.BlockSpec((Ip, Hp), lambda i: (0, 0)),              # W_ih^T (bf16)
                pl.BlockSpec((Hp, Hp), lambda i: (0, 0)),              # W_hh^T (f32)
                pl.BlockSpec((1, Hp), lambda i: (0, 0)),               # b_ih + b_hh
                pl.BlockSpec((Hp, Op), lambda i: (0, 0)),              # W_out^T / T (bf16)
                pl.BlockSpec((1, Op), lambda i: (0, 0)),               # b_out
            ],
            out_specs=[
                pl.BlockSpec((rows_per_blk, Op), lambda i: (i, 0)),    # log_probs
                pl.BlockSpec((Bp, Hp), lambda i: (0, 0)),              # final h
            ],
            scratch_shapes=[
                pltpu.VMEM((Bp, Hp), f32),                 # carried hidden state
                pltpu.VMEM((rows_per_blk, Hp), f32),       # per-block h_t staging
            ],
        ),
        compiler_params=pltpu.CompilerParams(
            dimension_semantics=("arbitrary",),   # sequential recurrence in time
        ),
    )(x, h0, wih_t, whh_t, b, wout_t, bout)

    log_probs = log_probs_flat.reshape(Sp, Bp, Op)[:S, :B, :O]
    log_probs = jnp.transpose(log_probs, (1, 0, 2))                    # (B, S, O)
    return log_probs, h_final[:B, :H][None]                            # (1, B, H)


def _ref_forward(inputs, hidden, temperature, params):
    """Pure-JAX reference mirroring the PyTorch module (eval-mode dropout)."""
    w_ih, w_hh, b_ih, b_hh, w_out, b_out = params

    def step(h, x_t):
        h_new = jnp.tanh(x_t @ w_ih.T + b_ih + h @ w_hh.T + b_hh)
        return h_new, h_new

    h_last, outs = jax.lax.scan(step, hidden[0], jnp.transpose(inputs, (1, 0, 2)))
    outs = jnp.transpose(outs, (1, 0, 2))                       # (B, S, H)
    logits = (outs * (1.0 / temperature)) @ w_out.T + b_out     # (B, S, O)
    return jax.nn.log_softmax(logits, axis=2), h_last[None]


if __name__ == "__main__":
    # Small shapes consistent with the module (module defaults: I=O=93, H=100).
    B, S, I, H, O = 2, 8, 16, 32, 16
    temperature = 2.0

    key = jax.random.PRNGKey(0)
    ks = jax.random.split(key, 8)
    scale = 1.0 / np.sqrt(H)
    params = (
        jax.random.uniform(ks[0], (H, I), jnp.float32, -scale, scale),   # W_ih
        jax.random.uniform(ks[1], (H, H), jnp.float32, -scale, scale),   # W_hh
        jax.random.uniform(ks[2], (H,), jnp.float32, -scale, scale),     # b_ih
        jax.random.uniform(ks[3], (H,), jnp.float32, -scale, scale),     # b_hh
        jax.random.uniform(ks[4], (O, H), jnp.float32, -scale, scale),   # W_out
        jax.random.uniform(ks[5], (O,), jnp.float32, -scale, scale),     # b_out
    )
    inputs = jax.random.normal(ks[6], (B, S, I), jnp.float32)
    hidden = jnp.zeros((1, B, H), jnp.float32)   # init_hidden: zeros(num_layers, B, H)

    log_probs, h_out = rnn_composer_forward(inputs, hidden, temperature, params)
    jax.block_until_ready((log_probs, h_out))

    ref_lp, ref_h = _ref_forward(inputs, hidden, temperature, params)
    # bf16 operands on the input/output projections (f32 accumulation) -> relaxed tolerance.
    np.testing.assert_allclose(np.asarray(log_probs), np.asarray(ref_lp), rtol=2e-2, atol=2e-2)
    np.testing.assert_allclose(np.asarray(h_out), np.asarray(ref_h), rtol=2e-2, atol=2e-2)

    print("KERNEL_OK")
</pallas_src>

<mosaic_0001>
module attributes {stable_mosaic.version = 11 : i64} {
  func.func @_fused_rnn_kernel(%arg0: i32, %arg1: memref<64x128xbf16, #tpu.memory_space<vmem>>, %arg2: memref<8x128xf32, #tpu.memory_space<vmem>>, %arg3: memref<128x128xbf16, #tpu.memory_space<vmem>>, %arg4: memref<128x128xf32, #tpu.memory_space<vmem>>, %arg5: memref<1x128xf32, #tpu.memory_space<vmem>>, %arg6: memref<128x128xbf16, #tpu.memory_space<vmem>>, %arg7: memref<1x128xf32, #tpu.memory_space<vmem>>, %arg8: memref<64x128xf32, #tpu.memory_space<vmem>>, %arg9: memref<8x128xf32, #tpu.memory_space<vmem>>, %arg10: memref<8x128xf32, #tpu.memory_space<vmem>>, %arg11: memref<64x128xf32, #tpu.memory_space<vmem>>) attributes {dimension_semantics = [#tpu.dimension_semantics<arbitrary>], iteration_bounds = array<i64: 1>, scalar_prefetch = 0 : i64, scratch_operands = 2 : i64, tpu.core_type = #tpu.core_type<tc>, window_params = [{transform_indices = @transform_0, window_bounds = array<i64: 64, 128>}, {pipeline_mode = #tpu.pipeline_mode<synchronous>, transform_indices = @transform_1, window_bounds = array<i64: 8, 128>}, {pipeline_mode = #tpu.pipeline_mode<synchronous>, transform_indices = @transform_2, window_bounds = array<i64: 128, 128>}, {pipeline_mode = #tpu.pipeline_mode<synchronous>, transform_indices = @transform_3, window_bounds = array<i64: 128, 128>}, {pipeline_mode = #tpu.pipeline_mode<synchronous>, transform_indices = @transform_4, window_bounds = array<i64: 1, 128>}, {pipeline_mode = #tpu.pipeline_mode<synchronous>, transform_indices = @transform_5, window_bounds = array<i64: 128, 128>}, {pipeline_mode = #tpu.pipeline_mode<synchronous>, transform_indices = @transform_6, window_bounds = array<i64: 1, 128>}, {transform_indices = @transform_7, window_bounds = array<i64: 64, 128>}, {pipeline_mode = #tpu.pipeline_mode<synchronous>, transform_indices = @transform_8, window_bounds = array<i64: 8, 128>}]} {
    %c0_i32 = arith.constant 0 : i32
    %0 = arith.cmpi eq, %arg0, %c0_i32 : i32
    %1 = arith.extui %0 : i1 to i32
    %c0_i32_0 = arith.constant 0 : i32
    %2 = arith.cmpi ne, %1, %c0_i32_0 : i32
    scf.if %2 {
      %c0_74 = arith.constant 0 : index
      %c0_75 = arith.constant 0 : index
      %114 = vector.load %arg2[%c0_74, %c0_75] : memref<8x128xf32, #tpu.memory_space<vmem>>, vector<8x128xf32>
      %c0_76 = arith.constant 0 : index
      %c0_77 = arith.constant 0 : index
      %115 = vector.load %arg10[%c0_76, %c0_77] : memref<8x128xf32, #tpu.memory_space<vmem>>, vector<8x128xf32>
      tpu.vector_store %arg10[%c0_76, %c0_77], %114 {strides = array<i32>} : memref<8x128xf32, #tpu.memory_space<vmem>>, vector<8x128xf32>,
    } else {
    }
    %c0 = arith.constant 0 : index
    %c0_1 = arith.constant 0 : index
    %3 = vector.load %arg1[%c0, %c0_1] : memref<64x128xbf16, #tpu.memory_space<vmem>>, vector<64x128xbf16>
    %c0_2 = arith.constant 0 : index
    %c0_3 = arith.constant 0 : index
    %4 = vector.load %arg3[%c0_2, %c0_3] : memref<128x128xbf16, #tpu.memory_space<vmem>>, vector<128x128xbf16>
    %cst = arith.constant dense<0.000000e+00> : vector<64x128xf32>
    %5 = tpu.matmul %3, %4, %cst {dimension_numbers = #tpu.dot_dimension_numbers<[1], [0], [0], [1], [0, 0, 1, 1], [], []>} : vector<64x128xbf16>, vector<128x128xbf16>, vector<64x128xf32> -> vector<64x128xf32>
    %c0_4 = arith.constant 0 : index
    %c0_5 = arith.constant 0 : index
    %6 = vector.load %arg5[%c0_4, %c0_5] : memref<1x128xf32, #tpu.memory_space<vmem>>, vector<1x128xf32>
    %7 = vector.broadcast %6 : vector<1x128xf32> to vector<64x128xf32>
    %8 = arith.addf %5, %7 : vector<64x128xf32>
    %c0_6 = arith.constant 0 : index
    %c0_7 = arith.constant 0 : index
    %9 = vector.load %arg11[%c0_6, %c0_7] : memref<64x128xf32, #tpu.memory_space<vmem>>, vector<64x128xf32>
    tpu.vector_store %arg11[%c0_6, %c0_7], %8 {strides = array<i32>} : memref<64x128xf32, #tpu.memory_space<vmem>>, vector<64x128xf32>,
    %c0_8 = arith.constant 0 : index
    %c0_9 = arith.constant 0 : index
    %10 = vector.load %arg10[%c0_8, %c0_9] : memref<8x128xf32, #tpu.memory_space<vmem>>, vector<8x128xf32>
    %c0_i32_10 = arith.constant 0 : i32
    %c8_i32 = arith.constant 8 : i32
    %11 = arith.muli %c0_i32_10, %c8_i32 : i32
    %12 = tpu.assume_multiple %11, 8 : i32
    %13 = arith.index_cast %12 : i32 to index
    %c0_11 = arith.constant 0 : index
    %14 = vector.load %arg11[%13, %c0_11] : memref<64x128xf32, #tpu.memory_space<vmem>>, vector<8x128xf32>
    %c0_12 = arith.constant 0 : index
    %c0_13 = arith.constant 0 : index
    %15 = vector.load %arg4[%c0_12, %c0_13] : memref<128x128xf32, #tpu.memory_space<vmem>>, vector<128x128xf32>
    %cst_14 = arith.constant dense<0.000000e+00> : vector<8x128xf32>
    %16 = tpu.matmul %10, %15, %cst_14 {dimension_numbers = #tpu.dot_dimension_numbers<[1], [0], [0], [1], [0, 0, 1, 1], [], []>} : vector<8x128xf32>, vector<128x128xf32>, vector<8x128xf32> -> vector<8x128xf32>
    %17 = arith.addf %14, %16 : vector<8x128xf32>
    %18 = math.tanh %17 : vector<8x128xf32>
    %19 = arith.index_cast %12 : i32 to index
    %c0_15 = arith.constant 0 : index
    %20 = vector.load %arg11[%19, %c0_15] : memref<64x128xf32, #tpu.memory_space<vmem>>, vector<8x128xf32>
    tpu.vector_store %arg11[%19, %c0_15], %18 {strides = array<i32>} : memref<64x128xf32, #tpu.memory_space<vmem>>, vector<8x128xf32>,
    %c1_i32 = arith.constant 1 : i32
    %c8_i32_16 = arith.constant 8 : i32
    %21 = arith.muli %c1_i32, %c8_i32_16 : i32
    %22 = tpu.assume_multiple %21, 8 : i32
    %23 = arith.index_cast %22 : i32 to index
    %c0_17 = arith.constant 0 : index
    %24 = vector.load %arg11[%23, %c0_17] : memref<64x128xf32, #tpu.memory_space<vmem>>, vector<8x128xf32>
    %c0_18 = arith.constant 0 : index
    %c0_19 = arith.constant 0 : index
    %25 = vector.load %arg4[%c0_18, %c0_19] : memref<128x128xf32, #tpu.memory_space<vmem>>, vector<128x128xf32>
    %cst_20 = arith.constant dense<0.000000e+00> : vector<8x128xf32>
    %26 = tpu.matmul %18, %25, %cst_20 {dimension_numbers = #tpu.dot_dimension_numbers<[1], [0], [0], [1], [0, 0, 1, 1], [], []>} : vector<8x128xf32>, vector<128x128xf32>, vector<8x128xf32> -> vector<8x128xf32>
    %27 = arith.addf %24, %26 : vector<8x128xf32>
    %28 = math.tanh %27 : vector<8x128xf32>
    %29 = arith.index_cast %22 : i32 to index
    %c0_21 = arith.constant 0 : index
    %30 = vector.load %arg11[%29, %c0_21] : memref<64x128xf32, #tpu.memory_space<vmem>>, vector<8x128xf32>
    tpu.vector_store %arg11[%29, %c0_21], %28 {strides = array<i32>} : memref<64x128xf32, #tpu.memory_space<vmem>>, vector<8x128xf32>,
    %c2_i32 = arith.constant 2 : i32
    %c8_i32_22 = arith.constant 8 : i32
    %31 = arith.muli %c2_i32, %c8_i32_22 : i32
    %32 = tpu.assume_multiple %31, 8 : i32
    %33 = arith.index_cast %32 : i32 to index
    %c0_23 = arith.constant 0 : index
    %34 = vector.load %arg11[%33, %c0_23] : memref<64x128xf32, #tpu.memory_space<vmem>>, vector<8x128xf32>
    %c0_24 = arith.constant 0 : index
    %c0_25 = arith.constant 0 : index
    %35 = vector.load %arg4[%c0_24, %c0_25] : memref<128x128xf32, #tpu.memory_space<vmem>>, vector<128x128xf32>
    %cst_26 = arith.constant dense<0.000000e+00> : vector<8x128xf32>
    %36 = tpu.matmul %28, %35, %cst_26 {dimension_numbers = #tpu.dot_dimension_numbers<[1], [0], [0], [1], [0, 0, 1, 1], [], []>} : vector<8x128xf32>, vector<128x128xf32>, vector<8x128xf32> -> vector<8x128xf32>
    %37 = arith.addf %34, %36 : vector<8x128xf32>
    %38 = math.tanh %37 : vector<8x128xf32>
    %39 = arith.index_cast %32 : i32 to index
    %c0_27 = arith.constant 0 : index
    %40 = vector.load %arg11[%39, %c0_27] : memref<64x128xf32, #tpu.memory_space<vmem>>, vector<8x128xf32>
    tpu.vector_store %arg11[%39, %c0_27], %38 {strides = array<i32>} : memref<64x128xf32, #tpu.memory_space<vmem>>, vector<8x128xf32>,
    %c3_i32 = arith.constant 3 : i32
    %c8_i32_28 = arith.constant 8 : i32
    %41 = arith.muli %c3_i32, %c8_i32_28 : i32
    %42 = tpu.assume_multiple %41, 8 : i32
    %43 = arith.index_cast %42 : i32 to index
    %c0_29 = arith.constant 0 : index
    %44 = vector.load %arg11[%43, %c0_29] : memref<64x128xf32, #tpu.memory_space<vmem>>, vector<8x128xf32>
    %c0_30 = arith.constant 0 : index
    %c0_31 = arith.constant 0 : index
    %45 = vector.load %arg4[%c0_30, %c0_31] : memref<128x128xf32, #tpu.memory_space<vmem>>, vector<128x128xf32>
    %cst_32 = arith.constant dense<0.000000e+00> : vector<8x128xf32>
    %46 = tpu.matmul %38, %45, %cst_32 {dimension_numbers = #tpu.dot_dimension_numbers<[1], [0], [0], [1], [0, 0, 1, 1], [], []>} : vector<8x128xf32>, vector<128x128xf32>, vector<8x128xf32> -> vector<8x128xf32>
    %47 = arith.addf %44, %46 : vector<8x128xf32>
    %48 = math.tanh %47 : vector<8x128xf32>
    %49 = arith.index_cast %42 : i32 to index
    %c0_33 = arith.constant 0 : index
    %50 = vector.load %arg11[%49, %c0_33] : memref<64x128xf32, #tpu.memory_space<vmem>>, vector<8x128xf32>
    tpu.vector_store %arg11[%49, %c0_33], %48 {strides = array<i32>} : memref<64x128xf32, #tpu.memory_space<vmem>>, vector<8x128xf32>,
    %c4_i32 = arith.constant 4 : i32
    %c8_i32_34 = arith.constant 8 : i32
    %51 = arith.muli %c4_i32, %c8_i32_34 : i32
    %52 = tpu.assume_multiple %51, 8 : i32
    %53 = arith.index_cast %52 : i32 to index
    %c0_35 = arith.constant 0 : index
    %54 = vector.load %arg11[%53, %c0_35] : memref<64x128xf32, #tpu.memory_space<vmem>>, vector<8x128xf32>
    %c0_36 = arith.constant 0 : index
    %c0_37 = arith.constant 0 : index
    %55 = vector.load %arg4[%c0_36, %c0_37] : memref<128x128xf32, #tpu.memory_space<vmem>>, vector<128x128xf32>
    %cst_38 = arith.constant dense<0.000000e+00> : vector<8x128xf32>
    %56 = tpu.matmul %48, %55, %cst_38 {dimension_numbers = #tpu.dot_dimension_numbers<[1], [0], [0], [1], [0, 0, 1, 1], [], []>} : vector<8x128xf32>, vector<128x128xf32>, vector<8x128xf32> -> vector<8x128xf32>
    %57 = arith.addf %54, %56 : vector<8x128xf32>
    %58 = math.tanh %57 : vector<8x128xf32>
    %59 = arith.index_cast %52 : i32 to index
    %c0_39 = arith.constant 0 : index
    %60 = vector.load %arg11[%59, %c0_39] : memref<64x128xf32, #tpu.memory_space<vmem>>, vector<8x128xf32>
    tpu.vector_store %arg11[%59, %c0_39], %58 {strides = array<i32>} : memref<64x128xf32, #tpu.memory_space<vmem>>, vector<8x128xf32>,
    %c5_i32 = arith.constant 5 : i32
    %c8_i32_40 = arith.constant 8 : i32
    %61 = arith.muli %c5_i32, %c8_i32_40 : i32
    %62 = tpu.assume_multiple %61, 8 : i32
    %63 = arith.index_cast %62 : i32 to index
    %c0_41 = arith.constant 0 : index
    %64 = vector.load %arg11[%63, %c0_41] : memref<64x128xf32, #tpu.memory_space<vmem>>, vector<8x128xf32>
    %c0_42 = arith.constant 0 : index
    %c0_43 = arith.constant 0 : index
    %65 = vector.load %arg4[%c0_42, %c0_43] : memref<128x128xf32, #tpu.memory_space<vmem>>, vector<128x128xf32>
    %cst_44 = arith.constant dense<0.000000e+00> : vector<8x128xf32>
    %66 = tpu.matmul %58, %65, %cst_44 {dimension_numbers = #tpu.dot_dimension_numbers<[1], [0], [0], [1], [0, 0, 1, 1], [], []>} : vector<8x128xf32>, vector<128x128xf32>, vector<8x128xf32> -> vector<8x128xf32>
    %67 = arith.addf %64, %66 : vector<8x128xf32>
    %68 = math.tanh %67 : vector<8x128xf32>
    %69 = arith.index_cast %62 : i32 to index
    %c0_45 = arith.constant 0 : index
    %70 = vector.load %arg11[%69, %c0_45] : memref<64x128xf32, #tpu.memory_space<vmem>>, vector<8x128xf32>
    tpu.vector_store %arg11[%69, %c0_45], %68 {strides = array<i32>} : memref<64x128xf32, #tpu.memory_space<vmem>>, vector<8x128xf32>,
    %c6_i32 = arith.constant 6 : i32
    %c8_i32_46 = arith.constant 8 : i32
    %71 = arith.muli %c6_i32, %c8_i32_46 : i32
    %72 = tpu.assume_multiple %71, 8 : i32
    %73 = arith.index_cast %72 : i32 to index
    %c0_47 = arith.constant 0 : index
    %74 = vector.load %arg11[%73, %c0_47] : memref<64x128xf32, #tpu.memory_space<vmem>>, vector<8x128xf32>
    %c0_48 = arith.constant 0 : index
    %c0_49 = arith.constant 0 : index
    %75 = vector.load %arg4[%c0_48, %c0_49] : memref<128x128xf32, #tpu.memory_space<vmem>>, vector<128x128xf32>
    %cst_50 = arith.constant dense<0.000000e+00> : vector<8x128xf32>
    %76 = tpu.matmul %68, %75, %cst_50 {dimension_numbers = #tpu.dot_dimension_numbers<[1], [0], [0], [1], [0, 0, 1, 1], [], []>} : vector<8x128xf32>, vector<128x128xf32>, vector<8x128xf32> -> vector<8x128xf32>
    %77 = arith.addf %74, %76 : vector<8x128xf32>
    %78 = math.tanh %77 : vector<8x128xf32>
    %79 = arith.index_cast %72 : i32 to index
    %c0_51 = arith.constant 0 : index
    %80 = vector.load %arg11[%79, %c0_51] : memref<64x128xf32, #tpu.memory_space<vmem>>, vector<8x128xf32>
    tpu.vector_store %arg11[%79, %c0_51], %78 {strides = array<i32>} : memref<64x128xf32, #tpu.memory_space<vmem>>, vector<8x128xf32>,
    %c7_i32 = arith.constant 7 : i32
    %c8_i32_52 = arith.constant 8 : i32
    %81 = arith.muli %c7_i32, %c8_i32_52 : i32
    %82 = tpu.assume_multiple %81, 8 : i32
    %83 = arith.index_cast %82 : i32 to index
    %c0_53 = arith.constant 0 : index
    %84 = vector.load %arg11[%83, %c0_53] : memref<64x128xf32, #tpu.memory_space<vmem>>, vector<8x128xf32>
    %c0_54 = arith.constant 0 : index
    %c0_55 = arith.constant 0 : index
    %85 = vector.load %arg4[%c0_54, %c0_55] : memref<128x128xf32, #tpu.memory_space<vmem>>, vector<128x128xf32>
    %cst_56 = arith.constant dense<0.000000e+00> : vector<8x128xf32>
    %86 = tpu.matmul %78, %85, %cst_56 {dimension_numbers = #tpu.dot_dimension_numbers<[1], [0], [0], [1], [0, 0, 1, 1], [], []>} : vector<8x128xf32>, vector<128x128xf32>, vector<8x128xf32> -> vector<8x128xf32>
    %87 = arith.addf %84, %86 : vector<8x128xf32>
    %88 = math.tanh %87 : vector<8x128xf32>
    %89 = arith.index_cast %82 : i32 to index
    %c0_57 = arith.constant 0 : index
    %90 = vector.load %arg11[%89, %c0_57] : memref<64x128xf32, #tpu.memory_space<vmem>>, vector<8x128xf32>
    tpu.vector_store %arg11[%89, %c0_57], %88 {strides = array<i32>} : memref<64x128xf32, #tpu.memory_space<vmem>>, vector<8x128xf32>,
    %c8_i32_58 = arith.constant 8 : i32
    %c0_59 = arith.constant 0 : index
    %c0_60 = arith.constant 0 : index
    %91 = vector.load %arg10[%c0_59, %c0_60] : memref<8x128xf32, #tpu.memory_space<vmem>>, vector<8x128xf32>
    tpu.vector_store %arg10[%c0_59, %c0_60], %88 {strides = array<i32>} : memref<8x128xf32, #tpu.memory_space<vmem>>, vector<8x128xf32>,
    %c0_i32_61 = arith.constant 0 : i32
    %92 = arith.cmpi eq, %arg0, %c0_i32_61 : i32
    %93 = arith.extui %92 : i1 to i32
    %c0_i32_62 = arith.constant 0 : i32
    %94 = arith.cmpi ne, %93, %c0_i32_62 : i32
    scf.if %94 {
      %c0_74 = arith.constant 0 : index
      %c0_75 = arith.constant 0 : index
      %114 = vector.load %arg9[%c0_74, %c0_75] : memref<8x128xf32, #tpu.memory_space<vmem>>, vector<8x128xf32>
      tpu.vector_store %arg9[%c0_74, %c0_75], %88 {strides = array<i32>} : memref<8x128xf32, #tpu.memory_space<vmem>>, vector<8x128xf32>,
    } else {
    }
    %c0_63 = arith.constant 0 : index
    %c0_64 = arith.constant 0 : index
    %95 = vector.load %arg11[%c0_63, %c0_64] : memref<64x128xf32, #tpu.memory_space<vmem>>, vector<64x128xf32>
    %96 = arith.truncf %95 : vector<64x128xf32> to vector<64x128xbf16>
    %c0_65 = arith.constant 0 : index
    %c0_66 = arith.constant 0 : index
    %97 = vector.load %arg6[%c0_65, %c0_66] : memref<128x128xbf16, #tpu.memory_space<vmem>>, vector<128x128xbf16>
    %cst_67 = arith.constant dense<0.000000e+00> : vector<64x128xf32>
    %98 = tpu.matmul %96, %97, %cst_67 {dimension_numbers = #tpu.dot_dimension_numbers<[1], [0], [0], [1], [0, 0, 1, 1], [], []>} : vector<64x128xbf16>, vector<128x128xbf16>, vector<64x128xf32> -> vector<64x128xf32>
    %c0_68 = arith.constant 0 : index
    %c0_69 = arith.constant 0 : index
    %99 = vector.load %arg7[%c0_68, %c0_69] : memref<1x128xf32, #tpu.memory_space<vmem>>, vector<1x128xf32>
    %100 = vector.broadcast %99 : vector<1x128xf32> to vector<64x128xf32>
    %101 = arith.addf %98, %100 : vector<64x128xf32>
    %cst_70 = arith.constant dense<0xFF800000> : vector<64xf32>
    %102 = vector.multi_reduction <maximumf>, %101, %cst_70 [1] : vector<64x128xf32> to vector<64xf32>
    %103 = vector.shape_cast %102 : vector<64xf32> to vector<64x1xf32>
    %104 = vector.broadcast %103 : vector<64x1xf32> to vector<64x128xf32>
    %105 = arith.subf %101, %104 : vector<64x128xf32>
    %106 = math.exp %105 : vector<64x128xf32>
    %cst_71 = arith.constant dense<0.000000e+00> : vector<64xf32>
    %107 = vector.multi_reduction <add>, %106, %cst_71 [1] : vector<64x128xf32> to vector<64xf32>
    %108 = vector.shape_cast %107 : vector<64xf32> to vector<64x1xf32>
    %109 = math.log %108 : vector<64x1xf32>
    %110 = arith.addf %109, %103 : vector<64x1xf32>
    %111 = vector.broadcast %110 : vector<64x1xf32> to vector<64x128xf32>
    %112 = arith.subf %101, %111 : vector<64x128xf32>
    %c0_72 = arith.constant 0 : index
    %c0_73 = arith.constant 0 : index
    %113 = vector.load %arg8[%c0_72, %c0_73] : memref<64x128xf32, #tpu.memory_space<vmem>>, vector<64x128xf32>
    tpu.vector_store %arg8[%c0_72, %c0_73], %112 {strides = array<i32>} : memref<64x128xf32, #tpu.memory_space<vmem>>, vector<64x128xf32>,
    return
  }
  func.func @transform_0(%arg0: i32) -> (i32, i32) {
    %c0_i32 = arith.constant 0 : i32
    %c0_i32_0 = arith.constant 0 : i32
    return %arg0, %c0_i32 : i32, i32
  }
  func.func @transform_1(%arg0: i32) -> (i32, i32) {
    %c0_i32 = arith.constant 0 : i32
    %c0_i32_0 = arith.constant 0 : i32
    %c0_i32_1 = arith.constant 0 : i32
    return %c0_i32, %c0_i32_0 : i32, i32
  }
  func.func @transform_2(%arg0: i32) -> (i32, i32) {
    %c0_i32 = arith.constant 0 : i32
    %c0_i32_0 = arith.constant 0 : i32
    %c0_i32_1 = arith.constant 0 : i32
    return %c0_i32, %c0_i32_0 : i32, i32
  }
  func.func @transform_3(%arg0: i32) -> (i32, i32) {
    %c0_i32 = arith.constant 0 : i32
    %c0_i32_0 = arith.constant 0 : i32
    %c0_i32_1 = arith.constant 0 : i32
    return %c0_i32, %c0_i32_0 : i32, i32
  }
  func.func @transform_4(%arg0: i32) -> (i32, i32) {
    %c0_i32 = arith.constant 0 : i32
    %c0_i32_0 = arith.constant 0 : i32
    %c0_i32_1 = arith.constant 0 : i32
    return %c0_i32, %c0_i32_0 : i32, i32
  }
  func.func @transform_5(%arg0: i32) -> (i32, i32) {
    %c0_i32 = arith.constant 0 : i32
    %c0_i32_0 = arith.constant 0 : i32
    %c0_i32_1 = arith.constant 0 : i32
    return %c0_i32, %c0_i32_0 : i32, i32
  }
  func.func @transform_6(%arg0: i32) -> (i32, i32) {
    %c0_i32 = arith.constant 0 : i32
    %c0_i32_0 = arith.constant 0 : i32
    %c0_i32_1 = arith.constant 0 : i32
    return %c0_i32, %c0_i32_0 : i32, i32
  }
  func.func @transform_7(%arg0: i32) -> (i32, i32) {
    %c0_i32 = arith.constant 0 : i32
    %c0_i32_0 = arith.constant 0 : i32
    return %arg0, %c0_i32 : i32, i32
  }
  func.func @transform_8(%arg0: i32) -> (i32, i32) {
    %c0_i32 = arith.constant 0 : i32
    %c0_i32_0 = arith.constant 0 : i32
    %c0_i32_1 = arith.constant 0 : i32
    return %c0_i32, %c0_i32_0 : i32, i32
  }
}

</mosaic_0001>

<llo_original>
// kernel: tpu_custom_call.1
$region0: #{tpu_custom_call.1}
  #allocation0 [shape = 'u32[]', space=smem, size = 0x4, offset = 0x4, fixed_abs, tag = 'smem constant byte address 0x4 - core index']
  #allocation1 [shape = 'u32[144,128]{1,0:T(1,128)}', space=vmem, size = 0x12000, scoped, tag = 'internal scratch']
  #allocation2 [shape = 'f32[8,128]{1,0:T(8,128)}', space=vmem, size = 0x1000, scoped, tag = 'scratch operand']
  #allocation3 [shape = 'f32[64,128]{1,0:T(8,128)}', space=vmem, size = 0x8000, scoped, tag = 'scratch operand']
  %s0 = inlined_call_operand.hbm [shape: bf16[64,128], index: 0, kind: input, shape index: {}]
  %s1 = inlined_call_operand.hbm [shape: f32[8,128], index: 1, kind: input, shape index: {}]
  %s2 = inlined_call_operand.hbm [shape: bf16[128,128], index: 2, kind: input, shape index: {}]
  %s3 = inlined_call_operand.hbm [shape: f32[128,128], index: 3, kind: input, shape index: {}]
  %s4 = inlined_call_operand.vmem [shape: f32[1,128], index: 4, kind: input, shape index: {}]
  %s5 = inlined_call_operand.hbm [shape: bf16[128,128], index: 5, kind: input, shape index: {}]
  %s6 = inlined_call_operand.vmem [shape: f32[1,128], index: 6, kind: input, shape index: {}]
  %s7 = inlined_call_operand.hbm [shape: f32[64,128], index: 7, kind: output, shape index: {0}]
  %s8 = inlined_call_operand.hbm [shape: f32[8,128], index: 8, kind: output, shape index: {1}]
  %9 = xla_tuple %s7, %s8
  %s10 = sld [smem:[#allocation0]]
  $region74: #{tpu_custom_call.1} parent=0
    _
  %s12 = ssub.s32 1, %s10
  %s13 = scalar_select 0, %s12, %s10
  $region1: #{tpu_custom_call.1} parent=0
    #allocation4 [shape = 'u8[16384]{0}', space=vmem, size = 0x4000, scoped, tag = 'input window, operand 0, single buffered']
    #allocation5 [shape = 's32[1]{0}', space=sflag, size = 0x4, scoped, tag = 'scoped memory for tpu_custom_call.1']
    #allocation6 [shape = 's32[1]{0}', space=sflag, size = 0x4, scoped, tag = 'scoped memory for tpu_custom_call.1']
    #allocation7 [shape = 'u8[4096]{0}', space=vmem, size = 0x1000, scoped, tag = 'input window, operand 1, single buffered']
    #allocation8 [shape = 's32[1]{0}', space=sflag, size = 0x4, scoped, tag = 'scoped memory for tpu_custom_call.1']
    #allocation9 [shape = 'u8[32768]{0}', space=vmem, size = 0x8000, scoped, tag = 'input window, operand 2, single buffered']
    #allocation10 [shape = 'u8[65536]{0}', space=vmem, size = 0x10000, scoped, tag = 'input window, operand 3, single buffered']
    #allocation11 [shape = 's32[1]{0}', space=sflag, size = 0x4, scoped, tag = 'scoped memory for tpu_custom_call.1']
    #allocation12 [shape = 'u8[32768]{0}', space=vmem, size = 0x8000, scoped, tag = 'input window, operand 5, single buffered']
    #allocation13 [shape = 'u8[32768]{0}', space=vmem, size = 0x8000, scoped, tag = 'output window, operand 0, single buffered']
    #allocation14 [shape = 'u8[4096]{0}', space=vmem, size = 0x1000, scoped, tag = 'output window, operand 1, single buffered']
    #allocation15 [shape = 's32[1]{0}', space=sflag, size = 0x4, scoped, tag = 'scoped memory for tpu_custom_call.1']
    %14 = vsyncpa [#allocation5], 0
    %15 = vsyncpa [#allocation8], 0
    %16 = vsyncpa [#allocation11], 0
    %17 = vsyncpa [#allocation6], 0
    %18 = vsyncpa [#allocation15], 0
    // Predicated region
    $region2: #{tpu_custom_call.1} parent=1 // pred_check
      _
    $region3: #{tpu_custom_call.1} parent=1 // pred_check_branch
      %20 = sbr.rel (0) target = $region5
    $region4: #{tpu_custom_call.1} parent=1 // pred_region
      %s22 = ssub.s32 512, 512
      %23 = vsyncadd [#allocation5], %s22
      %s24 = sshll.u32 [#allocation4], 4
      %s25 = int_to_ptr.vmem [resolvable:$true] %s24
      %30 = dma.hbm_to_vmem [thread:$0]  %s0, 512, %s25, [#allocation5], 64, 64, 4
    $region5: #{tpu_custom_call.1} parent=1 // pred_fallthru
      _
    // Predicated region
    $region6: #{tpu_custom_call.1} parent=1 // pred_check
      _
    $region7: #{tpu_custom_call.1} parent=1 // pred_check_branch
      %32 = sbr.rel (0) target = $region9
    $region8: #{tpu_custom_call.1} parent=1 // pred_region
      %s34 = ssub.s32 128, 128
      %35 = vsyncadd [#allocation8], %s34
      %s37 = sshll.u32 [#allocation7], 4
      %s38 = int_to_ptr.vmem [resolvable:$true] %s37
      %40 = dma.hbm_to_vmem [thread:$0]  %s1, 128, %s38, [#allocation8]
    $region9: #{tpu_custom_call.1} parent=1 // pred_fallthru
      _
    // Predicated region
    $region10: #{tpu_custom_call.1} parent=1 // pred_check
      _
    $region11: #{tpu_custom_call.1} parent=1 // pred_check_branch
      %42 = sbr.rel (0) target = $region13
    $region12: #{tpu_custom_call.1} parent=1 // pred_region
      %s44 = ssub.s32 1024, 1024
      %45 = vsyncadd [#allocation8], %s44
      %s46 = sshll.u32 [#allocation9], 4
      %s47 = int_to_ptr.vmem [resolvable:$true] %s46
      %52 = dma.hbm_to_vmem [thread:$0]  %s2, 1024, %s47, [#allocation8], 64, 64, 4
    $region13: #{tpu_custom_call.1} parent=1 // pred_fallthru
      _
    // Predicated region
    $region14: #{tpu_custom_call.1} parent=1 // pred_check
      _
    $region15: #{tpu_custom_call.1} parent=1 // pred_check_branch
      %54 = sbr.rel (0) target = $region17
    $region16: #{tpu_custom_call.1} parent=1 // pred_region
      %s56 = ssub.s32 2048, 2048
      %57 = vsyncadd [#allocation11], %s56
      %s58 = sshll.u32 [#allocation10], 4
      %s59 = int_to_ptr.vmem [resolvable:$true] %s58
      %64 = dma.hbm_to_vmem [thread:$0]  %s3, 2048, %s59, [#allocation11], 128, 128, 8
    $region17: #{tpu_custom_call.1} parent=1 // pred_fallthru
      _
    // Predicated region
    $region18: #{tpu_custom_call.1} parent=1 // pred_check
      _
    $region19: #{tpu_custom_call.1} parent=1 // pred_check_branch
      %66 = sbr.rel (0) target = $region21
    $region20: #{tpu_custom_call.1} parent=1 // pred_region
      _
    $region21: #{tpu_custom_call.1} parent=1 // pred_fallthru
      _
    // Predicated region
    $region22: #{tpu_custom_call.1} parent=1 // pred_check
      _
    $region23: #{tpu_custom_call.1} parent=1 // pred_check_branch
      %68 = sbr.rel (0) target = $region25
    $region24: #{tpu_custom_call.1} parent=1 // pred_region
      %s70 = ssub.s32 1024, 1024
      %71 = vsyncadd [#allocation11], %s70
      %s72 = sshll.u32 [#allocation12], 4
      %s73 = int_to_ptr.vmem [resolvable:$true] %s72
      %78 = dma.hbm_to_vmem [thread:$0]  %s5, 1024, %s73, [#allocation11], 64, 64, 4
    $region25: #{tpu_custom_call.1} parent=1 // pred_fallthru
      _
    // Predicated region
    $region26: #{tpu_custom_call.1} parent=1 // pred_check
      _
    $region27: #{tpu_custom_call.1} parent=1 // pred_check_branch
      %80 = sbr.rel (0) target = $region29
    $region28: #{tpu_custom_call.1} parent=1 // pred_region
      _
    $region29: #{tpu_custom_call.1} parent=1 // pred_fallthru
      _
    // Predicated region
    $region30: #{tpu_custom_call.1} parent=1 // pred_check
      _
    $region31: #{tpu_custom_call.1} parent=1 // pred_check_branch
      %82 = sbr.rel (0) target = $region33
    $region32: #{tpu_custom_call.1} parent=1 // pred_region
      %83 = dma.done [#allocation5], 512
    $region33: #{tpu_custom_call.1} parent=1 // pred_fallthru
      _
    // Predicated region
    $region34: #{tpu_custom_call.1} parent=1 // pred_check
      _
    $region35: #{tpu_custom_call.1} parent=1 // pred_check_branch
      %85 = sbr.rel (0) target = $region37
    $region36: #{tpu_custom_call.1} parent=1 // pred_region
      %86 = dma.done [#allocation8], 128
    $region37: #{tpu_custom_call.1} parent=1 // pred_fallthru
      _
    // Predicated region
    $region38: #{tpu_custom_call.1} parent=1 // pred_check
      _
    $region39: #{tpu_custom_call.1} parent=1 // pred_check_branch
      %88 = sbr.rel (0) target = $region41
    $region40: #{tpu_custom_call.1} parent=1 // pred_region
      %89 = dma.done [#allocation8], 1024
    $region41: #{tpu_custom_call.1} parent=1 // pred_fallthru
      _
    // Predicated region
    $region42: #{tpu_custom_call.1} parent=1 // pred_check
      _
    $region43: #{tpu_custom_call.1} parent=1 // pred_check_branch
      %91 = sbr.rel (0) target = $region45
    $region44: #{tpu_custom_call.1} parent=1 // pred_region
      %92 = dma.done [#allocation11], 2048
    $region45: #{tpu_custom_call.1} parent=1 // pred_fallthru
      _
    // Predicated region
    $region46: #{tpu_custom_call.1} parent=1 // pred_check
      _
    $region47: #{tpu_custom_call.1} parent=1 // pred_check_branch
      %94 = sbr.rel (0) target = $region49
    $region48: #{tpu_custom_call.1} parent=1 // pred_region
      %95 = dma.done [#allocation11], 1024
    $region49: #{tpu_custom_call.1} parent=1 // pred_fallthru
      _
    %p97 = scmp.eq.s32.totalorder 0, 0
    // Predicated region
    $region50: #{tpu_custom_call.1} parent=1 // pred_check
      %p98 = pneg %p97
    $region51: #{tpu_custom_call.1} parent=1 // pred_check_branch
      %100 = sbr.rel (%p98) target = $region53
    $region52: #{tpu_custom_call.1} parent=1 // pred_region
      %v101 = vld [vmem:[#allocation7] sm:$0xff]
      %102 = vst [vmem:[#allocation2] sm:$0xff] %v101
    $region53: #{tpu_custom_call.1} parent=1 // pred_fallthru
      _
    %v103 = vld [vmem:[#allocation4] sm:$0xf]
    %v104 = vld [vmem:[#allocation4 + $0x4] sm:$0xf]
    %v105 = vld [vmem:[#allocation4 + $0x8] sm:$0xf]
    %v106 = vld [vmem:[#allocation4 + $0xc] sm:$0xf]
    %v107 = vld [vmem:[#allocation4 + $0x10] sm:$0xf]
    %v108 = vld [vmem:[#allocation4 + $0x14] sm:$0xf]
    %v109 = vld [vmem:[#allocation4 + $0x18] sm:$0xf]
    %v110 = vld [vmem:[#allocation4 + $0x1c] sm:$0xf]
    %v111 = vld [vmem:[#allocation9] sm:$0xf]
    %v112 = vld [vmem:[#allocation9 + $0x4] sm:$0xf]
    %v113 = vld [vmem:[#allocation9 + $0x8] sm:$0xf]
    %v114 = vld [vmem:[#allocation9 + $0xc] sm:$0xf]
    %v115 = vld [vmem:[#allocation9 + $0x10] sm:$0xf]
    %v116 = vld [vmem:[#allocation9 + $0x14] sm:$0xf]
    %v117 = vld [vmem:[#allocation9 + $0x18] sm:$0xf]
    %v118 = vld [vmem:[#allocation9 + $0x1c] sm:$0xf]
    %v119 = vld [vmem:[#allocation9 + $0x20] sm:$0xf]
    %v120 = vld [vmem:[#allocation9 + $0x24] sm:$0xf]
    %v121 = vld [vmem:[#allocation9 + $0x28] sm:$0xf]
    %v122 = vld [vmem:[#allocation9 + $0x2c] sm:$0xf]
    %v123 = vld [vmem:[#allocation9 + $0x30] sm:$0xf]
    %v124 = vld [vmem:[#allocation9 + $0x34] sm:$0xf]
    %v125 = vld [vmem:[#allocation9 + $0x38] sm:$0xf]
    %v126 = vld [vmem:[#allocation9 + $0x3c] sm:$0xf]
    %v127 = vld [vmem:[%s4] sm:$0x1]
    %v129 = vlaneseq
    %v130 = vshrl.u32 %v129, 7
    %v131 = vsub.s32 0, %v130
    %v132 = vrot.slane %v127, %v131
    %v142 = vunpack.c.l.b16 %v103
    %v143 = vunpack.c.l.b16 %v104
    %v144 = vunpack.c.l.b16 %v105
    %v145 = vunpack.c.l.b16 %v106
    %v146 = vunpack.c.l.b16 %v107
    %v147 = vunpack.c.l.b16 %v108
    %v148 = vunpack.c.l.b16 %v109
    %v149 = vunpack.c.l.b16 %v110
    %v150 = vpack.c.b16 %v143, %v142
    %v151 = vpack.c.b16 %v145, %v144
    %v152 = vpack.c.b16 %v147, %v146
    %v153 = vpack.c.b16 %v149, %v148
    %v174 = vunpack.c.l.b16 %v111
    %v175 = vunpack.c.l.b16 %v112
    %v176 = vunpack.c.l.b16 %v113
    %v177 = vunpack.c.l.b16 %v114
    %v178 = vunpack.c.l.b16 %v115
    %v179 = vunpack.c.l.b16 %v116
    %v180 = vunpack.c.l.b16 %v117
    %v181 = vunpack.c.l.b16 %v118
    %v182 = vunpack.c.l.b16 %v119
    %v183 = vunpack.c.l.b16 %v120
    %v184 = vunpack.c.l.b16 %v121
    %v185 = vunpack.c.l.b16 %v122
    %v186 = vunpack.c.l.b16 %v123
    %v187 = vunpack.c.l.b16 %v124
    %v188 = vunpack.c.l.b16 %v125
    %v189 = vunpack.c.l.b16 %v126
    %v190 = vpack.c.b16 %v175, %v174
    %v191 = vpack.c.b16 %v177, %v176
    %v192 = vpack.c.b16 %v179, %v178
    %v193 = vpack.c.b16 %v181, %v180
    %v194 = vpack.c.b16 %v183, %v182
    %v195 = vpack.c.b16 %v185, %v184
    %v196 = vpack.c.b16 %v187, %v186
    %v197 = vpack.c.b16 %v189, %v188
    %206 = vmatprep.subr.bf16.mxu0 0
    %207 = vmatpush1.bf16.msra.mxu0 %v197
    %208 = vmatprep.subr.bf16.mxu0 0
    %209 = vmatpush1.bf16.msra.mxu0 %v196
    %210 = vmatprep.subr.bf16.mxu0 0
    %211 = vmatpush1.bf16.msra.mxu0 %v195
    %212 = vmatprep.subr.bf16.mxu0 0
    %213 = vmatpush1.bf16.msra.mxu0 %v194
    %214 = vmatprep.subr.bf16.mxu0 0
    %215 = vmatpush1.bf16.msra.mxu0 %v193
    %216 = vmatprep.subr.bf16.mxu0 0
    %217 = vmatpush1.bf16.msra.mxu0 %v192
    %218 = vmatprep.subr.bf16.mxu0 0
    %219 = vmatpush1.bf16.msra.mxu0 %v191
    %220 = vmatprep.subr.bf16.mxu0 0
    %221 = vmatpush1.bf16.msra.mxu0 %v190
    %222 = vmatprep.subr.bf16.mxu0 0
    %223 = vmatpush2.bf16.msra.mxu0 0
    %224 = vmatprep.subr.bf16.mxu0 0
    %225 = vmatpush2.bf16.msra.mxu0 0
    %226 = vmatprep.subr.bf16.mxu0 0
    %227 = vmatpush2.bf16.msra.mxu0 0
    %228 = vmatprep.subr.bf16.mxu0 0
    %229 = vmatpush2.bf16.msra.mxu0 0
    %230 = vmatprep.subr.bf16.mxu0 0
    %231 = vmatpush2.bf16.msra.mxu0 0
    %232 = vmatprep.subr.bf16.mxu0 0
    %233 = vmatpush2.bf16.msra.mxu0 0
    %234 = vmatprep.subr.bf16.mxu0 0
    %235 = vmatpush2.bf16.msra.mxu0 0
    %236 = vmatprep.subr.bf16.mxu0 0
    %237 = vmatpush2.bf16.msra.mxu0 0
    %238 = vmatprep.mubr.bf16.mxu0 0
    %239 = vmatmul.mubr.bf16.gmra.mxu0 %v150
    %v240 = vpop.f32.mrf.mxu0
    %v241 = vadd.f32 %v132, %v240
    %v242 = vpop.f32.mrf.mxu0
    %v243 = vpop.f32.mrf.mxu0
    %v244 = vadd.f32 %v132, %v243
    %v245 = vpop.f32.mrf.mxu0
    %246 = vmatprep.mubr.bf16.mxu0 0
    %247 = vmatmul.mubr.bf16.gmra.mxu0 %v151
    %v248 = vpop.f32.mrf.mxu0
    %v249 = vadd.f32 %v132, %v248
    %v250 = vpop.f32.mrf.mxu0
    %v251 = vpop.f32.mrf.mxu0
    %v252 = vadd.f32 %v132, %v251
    %v253 = vpop.f32.mrf.mxu0
    %254 = vmatprep.mubr.bf16.mxu0 0
    %255 = vmatmul.mubr.bf16.gmra.mxu0 %v152
    %v256 = vpop.f32.mrf.mxu0
    %v257 = vadd.f32 %v132, %v256
    %v258 = vpop.f32.mrf.mxu0
    %v259 = vpop.f32.mrf.mxu0
    %v260 = vadd.f32 %v132, %v259
    %v261 = vpop.f32.mrf.mxu0
    %262 = vmatprep.mubr.bf16.mxu0 0
    %263 = vmatmul.mubr.bf16.gmra.mxu0 %v153
    %v264 = vpop.f32.mrf.mxu0
    %v265 = vadd.f32 %v132, %v264
    %v266 = vpop.f32.mrf.mxu0
    %v267 = vpop.f32.mrf.mxu0
    %v268 = vadd.f32 %v132, %v267
    %v269 = vpop.f32.mrf.mxu0
    %270 = vdwg.mxu0
    %271 = vst [vmem:[#allocation3] sm:$0xff] %v241
    %272 = vst [vmem:[#allocation3 + $0x8] sm:$0xff] %v244
    %273 = vst [vmem:[#allocation3 + $0x10] sm:$0xff] %v249
    %274 = vst [vmem:[#allocation3 + $0x18] sm:$0xff] %v252
    %275 = vst [vmem:[#allocation3 + $0x20] sm:$0xff] %v257
    %276 = vst [vmem:[#allocation3 + $0x28] sm:$0xff] %v260
    %277 = vst [vmem:[#allocation3 + $0x30] sm:$0xff] %v265
    %278 = vst [vmem:[#allocation3 + $0x38] sm:$0xff] %v268
    %v279 = vld [vmem:[#allocation2] sm:$0xff]
    %v280 = vld [vmem:[#allocation3] sm:$0xff]
    %v281 = vld [vmem:[#allocation10] sm:$0xff]
    %v282 = vld [vmem:[#allocation10 + $0x8] sm:$0xff]
    %v283 = vld [vmem:[#allocation10 + $0x10] sm:$0xff]
    %v284 = vld [vmem:[#allocation10 + $0x18] sm:$0xff]
    %v285 = vld [vmem:[#allocation10 + $0x20] sm:$0xff]
    %v286 = vld [vmem:[#allocation10 + $0x28] sm:$0xff]
    %v287 = vld [vmem:[#allocation10 + $0x30] sm:$0xff]
    %v288 = vld [vmem:[#allocation10 + $0x38] sm:$0xff]
    %v289 = vld [vmem:[#allocation10 + $0x40] sm:$0xff]
    %v290 = vld [vmem:[#allocation10 + $0x48] sm:$0xff]
    %v291 = vld [vmem:[#allocation10 + $0x50] sm:$0xff]
    %v292 = vld [vmem:[#allocation10 + $0x58] sm:$0xff]
    %v293 = vld [vmem:[#allocation10 + $0x60] sm:$0xff]
    %v294 = vld [vmem:[#allocation10 + $0x68] sm:$0xff]
    %v295 = vld [vmem:[#allocation10 + $0x70] sm:$0xff]
    %v296 = vld [vmem:[#allocation10 + $0x78] sm:$0xff]
    %297 = vmatprep.subr.mxu0 0.0
    %298 = vmatpush1.msra.mxu0 %v296
    %299 = vmatprep.subr.mxu0 0.0
    %300 = vmatpush1.msra.mxu0 %v295
    %301 = vmatprep.subr.mxu0 0.0
    %302 = vmatpush1.msra.mxu0 %v294
    %303 = vmatprep.subr.mxu0 0.0
    %304 = vmatpush1.msra.mxu0 %v293
    %305 = vmatprep.subr.mxu0 0.0
    %306 = vmatpush1.msra.mxu0 %v292
    %307 = vmatprep.subr.mxu0 0.0
    %308 = vmatpush1.msra.mxu0 %v291
    %309 = vmatprep.subr.mxu0 0.0
    %310 = vmatpush1.msra.mxu0 %v290
    %311 = vmatprep.subr.mxu0 0.0
    %312 = vmatpush1.msra.mxu0 %v289
    %313 = vmatprep.subr.mxu0 0.0
    %314 = vmatpush1.msra.mxu0 %v288
    %315 = vmatprep.subr.mxu0 0.0
    %316 = vmatpush1.msra.mxu0 %v287
    %317 = vmatprep.subr.mxu0 0.0
    %318 = vmatpush1.msra.mxu0 %v286
    %319 = vmatprep.subr.mxu0 0.0
    %320 = vmatpush1.msra.mxu0 %v285
    %321 = vmatprep.subr.mxu0 0.0
    %322 = vmatpush1.msra.mxu0 %v284
    %323 = vmatprep.subr.mxu0 0.0
    %324 = vmatpush1.msra.mxu0 %v283
    %325 = vmatprep.subr.mxu0 0.0
    %326 = vmatpush1.msra.mxu0 %v282
    %327 = vmatprep.subr.mxu0 0.0
    %328 = vmatpush1.msra.mxu0 %v281
    %329 = vmatprep.subr.mxu0 0.0
    %330 = vmatpush2.msra.mxu0 0.0
    %331 = vmatprep.subr.mxu0 0.0
    %332 = vmatpush2.msra.mxu0 0.0
    %333 = vmatprep.subr.mxu0 0.0
    %334 = vmatpush2.msra.mxu0 0.0
    %335 = vmatprep.subr.mxu0 0.0
    %336 = vmatpush2.msra.mxu0 0.0
    %337 = vmatprep.subr.mxu0 0.0
    %338 = vmatpush2.msra.mxu0 0.0
    %339 = vmatprep.subr.mxu0 0.0
    %340 = vmatpush2.msra.mxu0 0.0
    %341 = vmatprep.subr.mxu0 0.0
    %342 = vmatpush2.msra.mxu0 0.0
    %343 = vmatprep.subr.mxu0 0.0
    %344 = vmatpush2.msra.mxu0 0.0
    %345 = vmatprep.subr.mxu0 0.0
    %346 = vmatpush2.msra.mxu0 0.0
    %347 = vmatprep.subr.mxu0 0.0
    %348 = vmatpush2.msra.mxu0 0.0
    %349 = vmatprep.subr.mxu0 0.0
    %350 = vmatpush2.msra.mxu0 0.0
    %351 = vmatprep.subr.mxu0 0.0
    %352 = vmatpush2.msra.mxu0 0.0
    %353 = vmatprep.subr.mxu0 0.0
    %354 = vmatpush2.msra.mxu0 0.0
    %355 = vmatprep.subr.mxu0 0.0
    %356 = vmatpush2.msra.mxu0 0.0
    %357 = vmatprep.subr.mxu0 0.0
    %358 = vmatpush2.msra.mxu0 0.0
    %359 = vmatprep.subr.mxu0 0.0
    %360 = vmatpush2.msra.mxu0 0.0
    %361 = vmatprep.mubr.f32.mxu0 0.0
    %362 = vmatmul.mubr.f32.gmra.mxu0 %v279
    %v363 = vpop.f32.mrf.mxu0
    %v364 = vadd.f32 0.0, %v363
    %v365 = vpop.f32.mrf.mxu0
    %366 = vdwg.mxu0
    %v367 = vadd.f32 %v280, %v364
    %v368 = vtanh.pop %v367
    %369 = vst [vmem:[#allocation3] sm:$0xff] %v368
    %s370 = scalar_lea.vmem [#allocation3], 8
    %v371 = vld [vmem:[%s370] sm:$0xff]
    %v372 = vld [vmem:[#allocation10] sm:$0xff]
    %v373 = vld [vmem:[#allocation10 + $0x8] sm:$0xff]
    %v374 = vld [vmem:[#allocation10 + $0x10] sm:$0xff]
    %v375 = vld [vmem:[#allocation10 + $0x18] sm:$0xff]
    %v376 = vld [vmem:[#allocation10 + $0x20] sm:$0xff]
    %v377 = vld [vmem:[#allocation10 + $0x28] sm:$0xff]
    %v378 = vld [vmem:[#allocation10 + $0x30] sm:$0xff]
    %v379 = vld [vmem:[#allocation10 + $0x38] sm:$0xff]
    %v380 = vld [vmem:[#allocation10 + $0x40] sm:$0xff]
    %v381 = vld [vmem:[#allocation10 + $0x48] sm:$0xff]
    %v382 = vld [vmem:[#allocation10 + $0x50] sm:$0xff]
    %v383 = vld [vmem:[#allocation10 + $0x58] sm:$0xff]
    %v384 = vld [vmem:[#allocation10 + $0x60] sm:$0xff]
    %v385 = vld [vmem:[#allocation10 + $0x68] sm:$0xff]
    %v386 = vld [vmem:[#allocation10 + $0x70] sm:$0xff]
    %v387 = vld [vmem:[#allocation10 + $0x78] sm:$0xff]
    %388 = vmatprep.subr.mxu0 0.0
    %389 = vmatpush1.msra.mxu0 %v387
    %390 = vmatprep.subr.mxu0 0.0
    %391 = vmatpush1.msra.mxu0 %v386
    %392 = vmatprep.subr.mxu0 0.0
    %393 = vmatpush1.msra.mxu0 %v385
    %394 = vmatprep.subr.mxu0 0.0
    %395 = vmatpush1.msra.mxu0 %v384
    %396 = vmatprep.subr.mxu0 0.0
    %397 = vmatpush1.msra.mxu0 %v383
    %398 = vmatprep.subr.mxu0 0.0
    %399 = vmatpush1.msra.mxu0 %v382
    %400 = vmatprep.subr.mxu0 0.0
    %401 = vmatpush1.msra.mxu0 %v381
    %402 = vmatprep.subr.mxu0 0.0
    %403 = vmatpush1.msra.mxu0 %v380
    %404 = vmatprep.subr.mxu0 0.0
    %405 = vmatpush1.msra.mxu0 %v379
    %406 = vmatprep.subr.mxu0 0.0
    %407 = vmatpush1.msra.mxu0 %v378
    %408 = vmatprep.subr.mxu0 0.0
    %409 = vmatpush1.msra.mxu0 %v377
    %410 = vmatprep.subr.mxu0 0.0
    %411 = vmatpush1.msra.mxu0 %v376
    %412 = vmatprep.subr.mxu0 0.0
    %413 = vmatpush1.msra.mxu0 %v375
    %414 = vmatprep.subr.mxu0 0.0
    %415 = vmatpush1.msra.mxu0 %v374
    %416 = vmatprep.subr.mxu0 0.0
    %417 = vmatpush1.msra.mxu0 %v373
    %418 = vmatprep.subr.mxu0 0.0
    %419 = vmatpush1.msra.mxu0 %v372
    %420 = vmatprep.subr.mxu0 0.0
    %421 = vmatpush2.msra.mxu0 0.0
    %422 = vmatprep.subr.mxu0 0.0
    %423 = vmatpush2.msra.mxu0 0.0
    %424 = vmatprep.subr.mxu0 0.0
    %425 = vmatpush2.msra.mxu0 0.0
    %426 = vmatprep.subr.mxu0 0.0
    %427 = vmatpush2.msra.mxu0 0.0
    %428 = vmatprep.subr.mxu0 0.0
    %429 = vmatpush2.msra.mxu0 0.0
    %430 = vmatprep.subr.mxu0 0.0
    %431 = vmatpush2.msra.mxu0 0.0
    %432 = vmatprep.subr.mxu0 0.0
    %433 = vmatpush2.msra.mxu0 0.0
    %434 = vmatprep.subr.mxu0 0.0
    %435 = vmatpush2.msra.mxu0 0.0
    %436 = vmatprep.subr.mxu0 0.0
    %437 = vmatpush2.msra.mxu0 0.0
    %438 = vmatprep.subr.mxu0 0.0
    %439 = vmatpush2.msra.mxu0 0.0
    %440 = vmatprep.subr.mxu0 0.0
    %441 = vmatpush2.msra.mxu0 0.0
    %442 = vmatprep.subr.mxu0 0.0
    %443 = vmatpush2.msra.mxu0 0.0
    %444 = vmatprep.subr.mxu0 0.0
    %445 = vmatpush2.msra.mxu0 0.0
    %446 = vmatprep.subr.mxu0 0.0
    %447 = vmatpush2.msra.mxu0 0.0
    %448 = vmatprep.subr.mxu0 0.0
    %449 = vmatpush2.msra.mxu0 0.0
    %450 = vmatprep.subr.mxu0 0.0
    %451 = vmatpush2.msra.mxu0 0.0
    %452 = vmatprep.mubr.f32.mxu0 0.0
    %453 = vmatmul.mubr.f32.gmra.mxu0 %v368
    %v454 = vpop.f32.mrf.mxu0
    %v455 = vadd.f32 0.0, %v454
    %v456 = vpop.f32.mrf.mxu0
    %457 = vdwg.mxu0
    %v458 = vadd.f32 %v371, %v455
    %v459 = vtanh.pop %v458
    %460 = vst [vmem:[%s370] sm:$0xff] %v459
    %s461 = scalar_lea.vmem [#allocation3], 16
    %v462 = vld [vmem:[%s461] sm:$0xff]
    %v463 = vld [vmem:[#allocation10] sm:$0xff]
    %v464 = vld [vmem:[#allocation10 + $0x8] sm:$0xff]
    %v465 = vld [vmem:[#allocation10 + $0x10] sm:$0xff]
    %v466 = vld [vmem:[#allocation10 + $0x18] sm:$0xff]
    %v467 = vld [vmem:[#allocation10 + $0x20] sm:$0xff]
    %v468 = vld [vmem:[#allocation10 + $0x28] sm:$0xff]
    %v469 = vld [vmem:[#allocation10 + $0x30] sm:$0xff]
    %v470 = vld [vmem:[#allocation10 + $0x38] sm:$0xff]
    %v471 = vld [vmem:[#allocation10 + $0x40] sm:$0xff]
    %v472 = vld [vmem:[#allocation10 + $0x48] sm:$0xff]
    %v473 = vld [vmem:[#allocation10 + $0x50] sm:$0xff]
    %v474 = vld [vmem:[#allocation10 + $0x58] sm:$0xff]
    %v475 = vld [vmem:[#allocation10 + $0x60] sm:$0xff]
    %v476 = vld [vmem:[#allocation10 + $0x68] sm:$0xff]
    %v477 = vld [vmem:[#allocation10 + $0x70] sm:$0xff]
    %v478 = vld [vmem:[#allocation10 + $0x78] sm:$0xff]
    %479 = vmatprep.subr.mxu0 0.0
    %480 = vmatpush1.msra.mxu0 %v478
    %481 = vmatprep.subr.mxu0 0.0
    %482 = vmatpush1.msra.mxu0 %v477
    %483 = vmatprep.subr.mxu0 0.0
    %484 = vmatpush1.msra.mxu0 %v476
    %485 = vmatprep.subr.mxu0 0.0
    %486 = vmatpush1.msra.mxu0 %v475
    %487 = vmatprep.subr.mxu0 0.0
    %488 = vmatpush1.msra.mxu0 %v474
    %489 = vmatprep.subr.mxu0 0.0
    %490 = vmatpush1.msra.mxu0 %v473
    %491 = vmatprep.subr.mxu0 0.0
    %492 = vmatpush1.msra.mxu0 %v472
    %493 = vmatprep.subr.mxu0 0.0
    %494 = vmatpush1.msra.mxu0 %v471
    %495 = vmatprep.subr.mxu0 0.0
    %496 = vmatpush1.msra.mxu0 %v470
    %497 = vmatprep.subr.mxu0 0.0
    %498 = vmatpush1.msra.mxu0 %v469
    %499 = vmatprep.subr.mxu0 0.0
    %500 = vmatpush1.msra.mxu0 %v468
    %501 = vmatprep.subr.mxu0 0.0
    %502 = vmatpush1.msra.mxu0 %v467
    %503 = vmatprep.subr.mxu0 0.0
    %504 = vmatpush1.msra.mxu0 %v466
    %505 = vmatprep.subr.mxu0 0.0
    %506 = vmatpush1.msra.mxu0 %v465
    %507 = vmatprep.subr.mxu0 0.0
    %508 = vmatpush1.msra.mxu0 %v464
    %509 = vmatprep.subr.mxu0 0.0
    %510 = vmatpush1.msra.mxu0 %v463
    %511 = vmatprep.subr.mxu0 0.0
    %512 = vmatpush2.msra.mxu0 0.0
    %513 = vmatprep.subr.mxu0 0.0
    %514 = vmatpush2.msra.mxu0 0.0
    %515 = vmatprep.subr.mxu0 0.0
    %516 = vmatpush2.msra.mxu0 0.0
    %517 = vmatprep.subr.mxu0 0.0
    %518 = vmatpush2.msra.mxu0 0.0
    %519 = vmatprep.subr.mxu0 0.0
    %520 = vmatpush2.msra.mxu0 0.0
    %521 = vmatprep.subr.mxu0 0.0
    %522 = vmatpush2.msra.mxu0 0.0
    %523 = vmatprep.subr.mxu0 0.0
    %524 = vmatpush2.msra.mxu0 0.0
    %525 = vmatprep.subr.mxu0 0.0
    %526 = vmatpush2.msra.mxu0 0.0
    %527 = vmatprep.subr.mxu0 0.0
    %528 = vmatpush2.msra.mxu0 0.0
    %529 = vmatprep.subr.mxu0 0.0
    %530 = vmatpush2.msra.mxu0 0.0
    %531 = vmatprep.subr.mxu0 0.0
    %532 = vmatpush2.msra.mxu0 0.0
    %533 = vmatprep.subr.mxu0 0.0
    %534 = vmatpush2.msra.mxu0 0.0
    %535 = vmatprep.subr.mxu0 0.0
    %536 = vmatpush2.msra.mxu0 0.0
    %537 = vmatprep.subr.mxu0 0.0
    %538 = vmatpush2.msra.mxu0 0.0
    %539 = vmatprep.subr.mxu0 0.0
    %540 = vmatpush2.msra.mxu0 0.0
    %541 = vmatprep.subr.mxu0 0.0
    %542 = vmatpush2.msra.mxu0 0.0
    %543 = vmatprep.mubr.f32.mxu0 0.0
    %544 = vmatmul.mubr.f32.gmra.mxu0 %v459
    %v545 = vpop.f32.mrf.mxu0
    %v546 = vadd.f32 0.0, %v545
    %v547 = vpop.f32.mrf.mxu0
    %548 = vdwg.mxu0
    %v549 = vadd.f32 %v462, %v546
    %v550 = vtanh.pop %v549
    %551 = vst [vmem:[%s461] sm:$0xff] %v550
    %s552 = scalar_lea.vmem [#allocation3], 24
    %v553 = vld [vmem:[%s552] sm:$0xff]
    %v554 = vld [vmem:[#allocation10] sm:$0xff]
    %v555 = vld [vmem:[#allocation10 + $0x8] sm:$0xff]
    %v556 = vld [vmem:[#allocation10 + $0x10] sm:$0xff]
    %v557 = vld [vmem:[#allocation10 + $0x18] sm:$0xff]
    %v558 = vld [vmem:[#allocation10 + $0x20] sm:$0xff]
    %v559 = vld [vmem:[#allocation10 + $0x28] sm:$0xff]
    %v560 = vld [vmem:[#allocation10 + $0x30] sm:$0xff]
    %v561 = vld [vmem:[#allocation10 + $0x38] sm:$0xff]
    %v562 = vld [vmem:[#allocation10 + $0x40] sm:$0xff]
    %v563 = vld [vmem:[#allocation10 + $0x48] sm:$0xff]
    %v564 = vld [vmem:[#allocation10 + $0x50] sm:$0xff]
    %v565 = vld [vmem:[#allocation10 + $0x58] sm:$0xff]
    %v566 = vld [vmem:[#allocation10 + $0x60] sm:$0xff]
    %v567 = vld [vmem:[#allocation10 + $0x68] sm:$0xff]
    %v568 = vld [vmem:[#allocation10 + $0x70] sm:$0xff]
    %v569 = vld [vmem:[#allocation10 + $0x78] sm:$0xff]
    %570 = vmatprep.subr.mxu0 0.0
    %571 = vmatpush1.msra.mxu0 %v569
    %572 = vmatprep.subr.mxu0 0.0
    %573 = vmatpush1.msra.mxu0 %v568
    %574 = vmatprep.subr.mxu0 0.0
    %575 = vmatpush1.msra.mxu0 %v567
    %576 = vmatprep.subr.mxu0 0.0
    %577 = vmatpush1.msra.mxu0 %v566
    %578 = vmatprep.subr.mxu0 0.0
    %579 = vmatpush1.msra.mxu0 %v565
    %580 = vmatprep.subr.mxu0 0.0
    %581 = vmatpush1.msra.mxu0 %v564
    %582 = vmatprep.subr.mxu0 0.0
    %583 = vmatpush1.msra.mxu0 %v563
    %584 = vmatprep.subr.mxu0 0.0
    %585 = vmatpush1.msra.mxu0 %v562
    %586 = vmatprep.subr.mxu0 0.0
    %587 = vmatpush1.msra.mxu0 %v561
    %588 = vmatprep.subr.mxu0 0.0
    %589 = vmatpush1.msra.mxu0 %v560
    %590 = vmatprep.subr.mxu0 0.0
    %591 = vmatpush1.msra.mxu0 %v559
    %592 = vmatprep.subr.mxu0 0.0
    %593 = vmatpush1.msra.mxu0 %v558
    %594 = vmatprep.subr.mxu0 0.0
    %595 = vmatpush1.msra.mxu0 %v557
    %596 = vmatprep.subr.mxu0 0.0
    %597 = vmatpush1.msra.mxu0 %v556
    %598 = vmatprep.subr.mxu0 0.0
    %599 = vmatpush1.msra.mxu0 %v555
    %600 = vmatprep.subr.mxu0 0.0
    %601 = vmatpush1.msra.mxu0 %v554
    %602 = vmatprep.subr.mxu0 0.0
    %603 = vmatpush2.msra.mxu0 0.0
    %604 = vmatprep.subr.mxu0 0.0
    %605 = vmatpush2.msra.mxu0 0.0
    %606 = vmatprep.subr.mxu0 0.0
    %607 = vmatpush2.msra.mxu0 0.0
    %608 = vmatprep.subr.mxu0 0.0
    %609 = vmatpush2.msra.mxu0 0.0
    %610 = vmatprep.subr.mxu0 0.0
    %611 = vmatpush2.msra.mxu0 0.0
    %612 = vmatprep.subr.mxu0 0.0
    %613 = vmatpush2.msra.mxu0 0.0
    %614 = vmatprep.subr.mxu0 0.0
    %615 = vmatpush2.msra.mxu0 0.0
    %616 = vmatprep.subr.mxu0 0.0
    %617 = vmatpush2.msra.mxu0 0.0
    %618 = vmatprep.subr.mxu0 0.0
    %619 = vmatpush2.msra.mxu0 0.0
    %620 = vmatprep.subr.mxu0 0.0
    %621 = vmatpush2.msra.mxu0 0.0
    %622 = vmatprep.subr.mxu0 0.0
    %623 = vmatpush2.msra.mxu0 0.0
    %624 = vmatprep.subr.mxu0 0.0
    %625 = vmatpush2.msra.mxu0 0.0
    %626 = vmatprep.subr.mxu0 0.0
    %627 = vmatpush2.msra.mxu0 0.0
    %628 = vmatprep.subr.mxu0 0.0
    %629 = vmatpush2.msra.mxu0 0.0
    %630 = vmatprep.subr.mxu0 0.0
    %631 = vmatpush2.msra.mxu0 0.0
    %632 = vmatprep.subr.mxu0 0.0
    %633 = vmatpush2.msra.mxu0 0.0
    %634 = vmatprep.mubr.f32.mxu0 0.0
    %635 = vmatmul.mubr.f32.gmra.mxu0 %v550
    %v636 = vpop.f32.mrf.mxu0
    %v637 = vadd.f32 0.0, %v636
    %v638 = vpop.f32.mrf.mxu0
    %639 = vdwg.mxu0
    %v640 = vadd.f32 %v553, %v637
    %v641 = vtanh.pop %v640
    %642 = vst [vmem:[%s552] sm:$0xff] %v641
    %s643 = scalar_lea.vmem [#allocation3], 32
    %v644 = vld [vmem:[%s643] sm:$0xff]
    %v645 = vld [vmem:[#allocation10] sm:$0xff]
    %v646 = vld [vmem:[#allocation10 + $0x8] sm:$0xff]
    %v647 = vld [vmem:[#allocation10 + $0x10] sm:$0xff]
    %v648 = vld [vmem:[#allocation10 + $0x18] sm:$0xff]
    %v649 = vld [vmem:[#allocation10 + $0x20] sm:$0xff]
    %v650 = vld [vmem:[#allocation10 + $0x28] sm:$0xff]
    %v651 = vld [vmem:[#allocation10 + $0x30] sm:$0xff]
    %v652 = vld [vmem:[#allocation10 + $0x38] sm:$0xff]
    %v653 = vld [vmem:[#allocation10 + $0x40] sm:$0xff]
    %v654 = vld [vmem:[#allocation10 + $0x48] sm:$0xff]
    %v655 = vld [vmem:[#allocation10 + $0x50] sm:$0xff]
    %v656 = vld [vmem:[#allocation10 + $0x58] sm:$0xff]
    %v657 = vld [vmem:[#allocation10 + $0x60] sm:$0xff]
    %v658 = vld [vmem:[#allocation10 + $0x68] sm:$0xff]
    %v659 = vld [vmem:[#allocation10 + $0x70] sm:$0xff]
    %v660 = vld [vmem:[#allocation10 + $0x78] sm:$0xff]
    %661 = vmatprep.subr.mxu0 0.0
    %662 = vmatpush1.msra.mxu0 %v660
    %663 = vmatprep.subr.mxu0 0.0
    %664 = vmatpush1.msra.mxu0 %v659
    %665 = vmatprep.subr.mxu0 0.0
    %666 = vmatpush1.msra.mxu0 %v658
    %667 = vmatprep.subr.mxu0 0.0
    %668 = vmatpush1.msra.mxu0 %v657
    %669 = vmatprep.subr.mxu0 0.0
    %670 = vmatpush1.msra.mxu0 %v656
    %671 = vmatprep.subr.mxu0 0.0
    %672 = vmatpush1.msra.mxu0 %v655
    %673 = vmatprep.subr.mxu0 0.0
    %674 = vmatpush1.msra.mxu0 %v654
    %675 = vmatprep.subr.mxu0 0.0
    %676 = vmatpush1.msra.mxu0 %v653
    %677 = vmatprep.subr.mxu0 0.0
    %678 = vmatpush1.msra.mxu0 %v652
    %679 = vmatprep.subr.mxu0 0.0
    %680 = vmatpush1.msra.mxu0 %v651
    %681 = vmatprep.subr.mxu0 0.0
    %682 = vmatpush1.msra.mxu0 %v650
    %683 = vmatprep.subr.mxu0 0.0
    %684 = vmatpush1.msra.mxu0 %v649
    %685 = vmatprep.subr.mxu0 0.0
    %686 = vmatpush1.msra.mxu0 %v648
    %687 = vmatprep.subr.mxu0 0.0
    %688 = vmatpush1.msra.mxu0 %v647
    %689 = vmatprep.subr.mxu0 0.0
    %690 = vmatpush1.msra.mxu0 %v646
    %691 = vmatprep.subr.mxu0 0.0
    %692 = vmatpush1.msra.mxu0 %v645
    %693 = vmatprep.subr.mxu0 0.0
    %694 = vmatpush2.msra.mxu0 0.0
    %695 = vmatprep.subr.mxu0 0.0
    %696 = vmatpush2.msra.mxu0 0.0
    %697 = vmatprep.subr.mxu0 0.0
    %698 = vmatpush2.msra.mxu0 0.0
    %699 = vmatprep.subr.mxu0 0.0
    %700 = vmatpush2.msra.mxu0 0.0
    %701 = vmatprep.subr.mxu0 0.0
    %702 = vmatpush2.msra.mxu0 0.0
    %703 = vmatprep.subr.mxu0 0.0
    %704 = vmatpush2.msra.mxu0 0.0
    %705 = vmatprep.subr.mxu0 0.0
    %706 = vmatpush2.msra.mxu0 0.0
    %707 = vmatprep.subr.mxu0 0.0
    %708 = vmatpush2.msra.mxu0 0.0
    %709 = vmatprep.subr.mxu0 0.0
    %710 = vmatpush2.msra.mxu0 0.0
    %711 = vmatprep.subr.mxu0 0.0
    %712 = vmatpush2.msra.mxu0 0.0
    %713 = vmatprep.subr.mxu0 0.0
    %714 = vmatpush2.msra.mxu0 0.0
    %715 = vmatprep.subr.mxu0 0.0
    %716 = vmatpush2.msra.mxu0 0.0
    %717 = vmatprep.subr.mxu0 0.0
    %718 = vmatpush2.msra.mxu0 0.0
    %719 = vmatprep.subr.mxu0 0.0
    %720 = vmatpush2.msra.mxu0 0.0
    %721 = vmatprep.subr.mxu0 0.0
    %722 = vmatpush2.msra.mxu0 0.0
    %723 = vmatprep.subr.mxu0 0.0
    %724 = vmatpush2.msra.mxu0 0.0
    %725 = vmatprep.mubr.f32.mxu0 0.0
    %726 = vmatmul.mubr.f32.gmra.mxu0 %v641
    %v727 = vpop.f32.mrf.mxu0
    %v728 = vadd.f32 0.0, %v727
    %v729 = vpop.f32.mrf.mxu0
    %730 = vdwg.mxu0
    %v731 = vadd.f32 %v644, %v728
    %v732 = vtanh.pop %v731
    %733 = vst [vmem:[%s643] sm:$0xff] %v732
    %s734 = scalar_lea.vmem [#allocation3], 40
    %v735 = vld [vmem:[%s734] sm:$0xff]
    %v736 = vld [vmem:[#allocation10] sm:$0xff]
    %v737 = vld [vmem:[#allocation10 + $0x8] sm:$0xff]
    %v738 = vld [vmem:[#allocation10 + $0x10] sm:$0xff]
    %v739 = vld [vmem:[#allocation10 + $0x18] sm:$0xff]
    %v740 = vld [vmem:[#allocation10 + $0x20] sm:$0xff]
    %v741 = vld [vmem:[#allocation10 + $0x28] sm:$0xff]
    %v742 = vld [vmem:[#allocation10 + $0x30] sm:$0xff]
    %v743 = vld [vmem:[#allocation10 + $0x38] sm:$0xff]
    %v744 = vld [vmem:[#allocation10 + $0x40] sm:$0xff]
    %v745 = vld [vmem:[#allocation10 + $0x48] sm:$0xff]
    %v746 = vld [vmem:[#allocation10 + $0x50] sm:$0xff]
    %v747 = vld [vmem:[#allocation10 + $0x58] sm:$0xff]
    %v748 = vld [vmem:[#allocation10 + $0x60] sm:$0xff]
    %v749 = vld [vmem:[#allocation10 + $0x68] sm:$0xff]
    %v750 = vld [vmem:[#allocation10 + $0x70] sm:$0xff]
    %v751 = vld [vmem:[#allocation10 + $0x78] sm:$0xff]
    %752 = vmatprep.subr.mxu0 0.0
    %753 = vmatpush1.msra.mxu0 %v751
    %754 = vmatprep.subr.mxu0 0.0
    %755 = vmatpush1.msra.mxu0 %v750
    %756 = vmatprep.subr.mxu0 0.0
    %757 = vmatpush1.msra.mxu0 %v749
    %758 = vmatprep.subr.mxu0 0.0
    %759 = vmatpush1.msra.mxu0 %v748
    %760 = vmatprep.subr.mxu0 0.0
    %761 = vmatpush1.msra.mxu0 %v747
    %762 = vmatprep.subr.mxu0 0.0
    %763 = vmatpush1.msra.mxu0 %v746
    %764 = vmatprep.subr.mxu0 0.0
    %765 = vmatpush1.msra.mxu0 %v745
    %766 = vmatprep.subr.mxu0 0.0
    %767 = vmatpush1.msra.mxu0 %v744
    %768 = vmatprep.subr.mxu0 0.0
    %769 = vmatpush1.msra.mxu0 %v743
    %770 = vmatprep.subr.mxu0 0.0
    %771 = vmatpush1.msra.mxu0 %v742
    %772 = vmatprep.subr.mxu0 0.0
    %773 = vmatpush1.msra.mxu0 %v741
    %774 = vmatprep.subr.mxu0 0.0
    %775 = vmatpush1.msra.mxu0 %v740
    %776 = vmatprep.subr.mxu0 0.0
    %777 = vmatpush1.msra.mxu0 %v739
    %778 = vmatprep.subr.mxu0 0.0
    %779 = vmatpush1.msra.mxu0 %v738
    %780 = vmatprep.subr.mxu0 0.0
    %781 = vmatpush1.msra.mxu0 %v737
    %782 = vmatprep.subr.mxu0 0.0
    %783 = vmatpush1.msra.mxu0 %v736
    %784 = vmatprep.subr.mxu0 0.0
    %785 = vmatpush2.msra.mxu0 0.0
    %786 = vmatprep.subr.mxu0 0.0
    %787 = vmatpush2.msra.mxu0 0.0
    %788 = vmatprep.subr.mxu0 0.0
    %789 = vmatpush2.msra.mxu0 0.0
    %790 = vmatprep.subr.mxu0 0.0
    %791 = vmatpush2.msra.mxu0 0.0
    %792 = vmatprep.subr.mxu0 0.0
    %793 = vmatpush2.msra.mxu0 0.0
    %794 = vmatprep.subr.mxu0 0.0
    %795 = vmatpush2.msra.mxu0 0.0
    %796 = vmatprep.subr.mxu0 0.0
    %797 = vmatpush2.msra.mxu0 0.0
    %798 = vmatprep.subr.mxu0 0.0
    %799 = vmatpush2.msra.mxu0 0.0
    %800 = vmatprep.subr.mxu0 0.0
    %801 = vmatpush2.msra.mxu0 0.0
    %802 = vmatprep.subr.mxu0 0.0
    %803 = vmatpush2.msra.mxu0 0.0
    %804 = vmatprep.subr.mxu0 0.0
    %805 = vmatpush2.msra.mxu0 0.0
    %806 = vmatprep.subr.mxu0 0.0
    %807 = vmatpush2.msra.mxu0 0.0
    %808 = vmatprep.subr.mxu0 0.0
    %809 = vmatpush2.msra.mxu0 0.0
    %810 = vmatprep.subr.mxu0 0.0
    %811 = vmatpush2.msra.mxu0 0.0
    %812 = vmatprep.subr.mxu0 0.0
    %813 = vmatpush2.msra.mxu0 0.0
    %814 = vmatprep.subr.mxu0 0.0
    %815 = vmatpush2.msra.mxu0 0.0
    %816 = vmatprep.mubr.f32.mxu0 0.0
    %817 = vmatmul.mubr.f32.gmra.mxu0 %v732
    %v818 = vpop.f32.mrf.mxu0
    %v819 = vadd.f32 0.0, %v818
    %v820 = vpop.f32.mrf.mxu0
    %821 = vdwg.mxu0
    %v822 = vadd.f32 %v735, %v819
    %v823 = vtanh.pop %v822
    %824 = vst [vmem:[%s734] sm:$0xff] %v823
    %s825 = scalar_lea.vmem [#allocation3], 48
    %v826 = vld [vmem:[%s825] sm:$0xff]
    %v827 = vld [vmem:[#allocation10] sm:$0xff]
    %v828 = vld [vmem:[#allocation10 + $0x8] sm:$0xff]
    %v829 = vld [vmem:[#allocation10 + $0x10] sm:$0xff]
    %v830 = vld [vmem:[#allocation10 + $0x18] sm:$0xff]
    %v831 = vld [vmem:[#allocation10 + $0x20] sm:$0xff]
    %v832 = vld [vmem:[#allocation10 + $0x28] sm:$0xff]
    %v833 = vld [vmem:[#allocation10 + $0x30] sm:$0xff]
    %v834 = vld [vmem:[#allocation10 + $0x38] sm:$0xff]
    %v835 = vld [vmem:[#allocation10 + $0x40] sm:$0xff]
    %v836 = vld [vmem:[#allocation10 + $0x48] sm:$0xff]
    %v837 = vld [vmem:[#allocation10 + $0x50] sm:$0xff]
    %v838 = vld [vmem:[#allocation10 + $0x58] sm:$0xff]
    %v839 = vld [vmem:[#allocation10 + $0x60] sm:$0xff]
    %v840 = vld [vmem:[#allocation10 + $0x68] sm:$0xff]
    %v841 = vld [vmem:[#allocation10 + $0x70] sm:$0xff]
    %v842 = vld [vmem:[#allocation10 + $0x78] sm:$0xff]
    %843 = vmatprep.subr.mxu0 0.0
    %844 = vmatpush1.msra.mxu0 %v842
    %845 = vmatprep.subr.mxu0 0.0
    %846 = vmatpush1.msra.mxu0 %v841
    %847 = vmatprep.subr.mxu0 0.0
    %848 = vmatpush1.msra.mxu0 %v840
    %849 = vmatprep.subr.mxu0 0.0
    %850 = vmatpush1.msra.mxu0 %v839
    %851 = vmatprep.subr.mxu0 0.0
    %852 = vmatpush1.msra.mxu0 %v838
    %853 = vmatprep.subr.mxu0 0.0
    %854 = vmatpush1.msra.mxu0 %v837
    %855 = vmatprep.subr.mxu0 0.0
    %856 = vmatpush1.msra.mxu0 %v836
    %857 = vmatprep.subr.mxu0 0.0
    %858 = vmatpush1.msra.mxu0 %v835
    %859 = vmatprep.subr.mxu0 0.0
    %860 = vmatpush1.msra.mxu0 %v834
    %861 = vmatprep.subr.mxu0 0.0
    %862 = vmatpush1.msra.mxu0 %v833
    %863 = vmatprep.subr.mxu0 0.0
    %864 = vmatpush1.msra.mxu0 %v832
    %865 = vmatprep.subr.mxu0 0.0
    %866 = vmatpush1.msra.mxu0 %v831
    %867 = vmatprep.subr.mxu0 0.0
    %868 = vmatpush1.msra.mxu0 %v830
    %869 = vmatprep.subr.mxu0 0.0
    %870 = vmatpush1.msra.mxu0 %v829
    %871 = vmatprep.subr.mxu0 0.0
    %872 = vmatpush1.msra.mxu0 %v828
    %873 = vmatprep.subr.mxu0 0.0
    %874 = vmatpush1.msra.mxu0 %v827
    %875 = vmatprep.subr.mxu0 0.0
    %876 = vmatpush2.msra.mxu0 0.0
    %877 = vmatprep.subr.mxu0 0.0
    %878 = vmatpush2.msra.mxu0 0.0
    %879 = vmatprep.subr.mxu0 0.0
    %880 = vmatpush2.msra.mxu0 0.0
    %881 = vmatprep.subr.mxu0 0.0
    %882 = vmatpush2.msra.mxu0 0.0
    %883 = vmatprep.subr.mxu0 0.0
    %884 = vmatpush2.msra.mxu0 0.0
    %885 = vmatprep.subr.mxu0 0.0
    %886 = vmatpush2.msra.mxu0 0.0
    %887 = vmatprep.subr.mxu0 0.0
    %888 = vmatpush2.msra.mxu0 0.0
    %889 = vmatprep.subr.mxu0 0.0
    %890 = vmatpush2.msra.mxu0 0.0
    %891 = vmatprep.subr.mxu0 0.0
    %892 = vmatpush2.msra.mxu0 0.0
    %893 = vmatprep.subr.mxu0 0.0
    %894 = vmatpush2.msra.mxu0 0.0
    %895 = vmatprep.subr.mxu0 0.0
    %896 = vmatpush2.msra.mxu0 0.0
    %897 = vmatprep.subr.mxu0 0.0
    %898 = vmatpush2.msra.mxu0 0.0
    %899 = vmatprep.subr.mxu0 0.0
    %900 = vmatpush2.msra.mxu0 0.0
    %901 = vmatprep.subr.mxu0 0.0
    %902 = vmatpush2.msra.mxu0 0.0
    %903 = vmatprep.subr.mxu0 0.0
    %904 = vmatpush2.msra.mxu0 0.0
    %905 = vmatprep.subr.mxu0 0.0
    %906 = vmatpush2.msra.mxu0 0.0
    %907 = vmatprep.mubr.f32.mxu0 0.0
    %908 = vmatmul.mubr.f32.gmra.mxu0 %v823
    %v909 = vpop.f32.mrf.mxu0
    %v910 = vadd.f32 0.0, %v909
    %v911 = vpop.f32.mrf.mxu0
    %912 = vdwg.mxu0
    %v913 = vadd.f32 %v826, %v910
    %v914 = vtanh.pop %v913
    %915 = vst [vmem:[%s825] sm:$0xff] %v914
    %s916 = scalar_lea.vmem [#allocation3], 56
    %v917 = vld [vmem:[%s916] sm:$0xff]
    %v918 = vld [vmem:[#allocation10] sm:$0xff]
    %v919 = vld [vmem:[#allocation10 + $0x8] sm:$0xff]
    %v920 = vld [vmem:[#allocation10 + $0x10] sm:$0xff]
    %v921 = vld [vmem:[#allocation10 + $0x18] sm:$0xff]
    %v922 = vld [vmem:[#allocation10 + $0x20] sm:$0xff]
    %v923 = vld [vmem:[#allocation10 + $0x28] sm:$0xff]
    %v924 = vld [vmem:[#allocation10 + $0x30] sm:$0xff]
    %v925 = vld [vmem:[#allocation10 + $0x38] sm:$0xff]
    %v926 = vld [vmem:[#allocation10 + $0x40] sm:$0xff]
    %v927 = vld [vmem:[#allocation10 + $0x48] sm:$0xff]
    %v928 = vld [vmem:[#allocation10 + $0x50] sm:$0xff]
    %v929 = vld [vmem:[#allocation10 + $0x58] sm:$0xff]
    %v930 = vld [vmem:[#allocation10 + $0x60] sm:$0xff]
    %v931 = vld [vmem:[#allocation10 + $0x68] sm:$0xff]
    %v932 = vld [vmem:[#allocation10 + $0x70] sm:$0xff]
    %v933 = vld [vmem:[#allocation10 + $0x78] sm:$0xff]
    %934 = vmatprep.subr.mxu0 0.0
    %935 = vmatpush1.msra.mxu0 %v933
    %936 = vmatprep.subr.mxu0 0.0
    %937 = vmatpush1.msra.mxu0 %v932
    %938 = vmatprep.subr.mxu0 0.0
    %939 = vmatpush1.msra.mxu0 %v931
    %940 = vmatprep.subr.mxu0 0.0
    %941 = vmatpush1.msra.mxu0 %v930
    %942 = vmatprep.subr.mxu0 0.0
    %943 = vmatpush1.msra.mxu0 %v929
    %944 = vmatprep.subr.mxu0 0.0
    %945 = vmatpush1.msra.mxu0 %v928
    %946 = vmatprep.subr.mxu0 0.0
    %947 = vmatpush1.msra.mxu0 %v927
    %948 = vmatprep.subr.mxu0 0.0
    %949 = vmatpush1.msra.mxu0 %v926
    %950 = vmatprep.subr.mxu0 0.0
    %951 = vmatpush1.msra.mxu0 %v925
    %952 = vmatprep.subr.mxu0 0.0
    %953 = vmatpush1.msra.mxu0 %v924
    %954 = vmatprep.subr.mxu0 0.0
    %955 = vmatpush1.msra.mxu0 %v923
    %956 = vmatprep.subr.mxu0 0.0
    %957 = vmatpush1.msra.mxu0 %v922
    %958 = vmatprep.subr.mxu0 0.0
    %959 = vmatpush1.msra.mxu0 %v921
    %960 = vmatprep.subr.mxu0 0.0
    %961 = vmatpush1.msra.mxu0 %v920
    %962 = vmatprep.subr.mxu0 0.0
    %963 = vmatpush1.msra.mxu0 %v919
    %964 = vmatprep.subr.mxu0 0.0
    %965 = vmatpush1.msra.mxu0 %v918
    %966 = vmatprep.subr.mxu0 0.0
    %967 = vmatpush2.msra.mxu0 0.0
    %968 = vmatprep.subr.mxu0 0.0
    %969 = vmatpush2.msra.mxu0 0.0
    %970 = vmatprep.subr.mxu0 0.0
    %971 = vmatpush2.msra.mxu0 0.0
    %972 = vmatprep.subr.mxu0 0.0
    %973 = vmatpush2.msra.mxu0 0.0
    %974 = vmatprep.subr.mxu0 0.0
    %975 = vmatpush2.msra.mxu0 0.0
    %976 = vmatprep.subr.mxu0 0.0
    %977 = vmatpush2.msra.mxu0 0.0
    %978 = vmatprep.subr.mxu0 0.0
    %979 = vmatpush2.msra.mxu0 0.0
    %980 = vmatprep.subr.mxu0 0.0
    %981 = vmatpush2.msra.mxu0 0.0
    %982 = vmatprep.subr.mxu0 0.0
    %983 = vmatpush2.msra.mxu0 0.0
    %984 = vmatprep.subr.mxu0 0.0
    %985 = vmatpush2.msra.mxu0 0.0
    %986 = vmatprep.subr.mxu0 0.0
    %987 = vmatpush2.msra.mxu0 0.0
    %988 = vmatprep.subr.mxu0 0.0
    %989 = vmatpush2.msra.mxu0 0.0
    %990 = vmatprep.subr.mxu0 0.0
    %991 = vmatpush2.msra.mxu0 0.0
    %992 = vmatprep.subr.mxu0 0.0
    %993 = vmatpush2.msra.mxu0 0.0
    %994 = vmatprep.subr.mxu0 0.0
    %995 = vmatpush2.msra.mxu0 0.0
    %996 = vmatprep.subr.mxu0 0.0
    %997 = vmatpush2.msra.mxu0 0.0
    %998 = vmatprep.mubr.f32.mxu0 0.0
    %999 = vmatmul.mubr.f32.gmra.mxu0 %v914
    %v1000 = vpop.f32.mrf.mxu0
    %v1001 = vadd.f32 0.0, %v1000
    %v1002 = vpop.f32.mrf.mxu0
    %1003 = vdwg.mxu0
    %v1004 = vadd.f32 %v917, %v1001
    %v1005 = vtanh.pop %v1004
    %1006 = vst [vmem:[%s916] sm:$0xff] %v1005
    %1007 = vst [vmem:[#allocation2] sm:$0xff] %v1005
    // Predicated region
    $region54: #{tpu_custom_call.1} parent=1 // pred_check
      %p1008 = pneg %p97
    $region55: #{tpu_custom_call.1} parent=1 // pred_check_branch
      %1010 = sbr.rel (%p1008) target = $region57
    $region56: #{tpu_custom_call.1} parent=1 // pred_region
      %1011 = vst [vmem:[#allocation14] sm:$0xff] %v1005
    $region57: #{tpu_custom_call.1} parent=1 // pred_fallthru
      _
    %v1012 = vld [vmem:[#allocation3] sm:$0xff]
    %v1013 = vld [vmem:[#allocation3 + $0x8] sm:$0xff]
    %v1014 = vld [vmem:[#allocation3 + $0x10] sm:$0xff]
    %v1015 = vld [vmem:[#allocation3 + $0x18] sm:$0xff]
    %v1016 = vld [vmem:[#allocation3 + $0x20] sm:$0xff]
    %v1017 = vld [vmem:[#allocation3 + $0x28] sm:$0xff]
    %v1018 = vld [vmem:[#allocation3 + $0x30] sm:$0xff]
    %v1019 = vld [vmem:[#allocation3 + $0x38] sm:$0xff]
    %v1020 = vpack.c.bf16 %v1013, %v1012
    %v1021 = vpack.c.bf16 %v1015, %v1014
    %v1022 = vpack.c.bf16 %v1017, %v1016
    %v1023 = vpack.c.bf16 %v1019, %v1018
    %v1024 = vld [vmem:[#allocation12] sm:$0xf]
    %v1025 = vld [vmem:[#allocation12 + $0x4] sm:$0xf]
    %v1026 = vld [vmem:[#allocation12 + $0x8] sm:$0xf]
    %v1027 = vld [vmem:[#allocation12 + $0xc] sm:$0xf]
    %v1028 = vld [vmem:[#allocation12 + $0x10] sm:$0xf]
    %v1029 = vld [vmem:[#allocation12 + $0x14] sm:$0xf]
    %v1030 = vld [vmem:[#allocation12 + $0x18] sm:$0xf]
    %v1031 = vld [vmem:[#allocation12 + $0x1c] sm:$0xf]
    %v1032 = vld [vmem:[#allocation12 + $0x20] sm:$0xf]
    %v1033 = vld [vmem:[#allocation12 + $0x24] sm:$0xf]
    %v1034 = vld [vmem:[#allocation12 + $0x28] sm:$0xf]
    %v1035 = vld [vmem:[#allocation12 + $0x2c] sm:$0xf]
    %v1036 = vld [vmem:[#allocation12 + $0x30] sm:$0xf]
    %v1037 = vld [vmem:[#allocation12 + $0x34] sm:$0xf]
    %v1038 = vld [vmem:[#allocation12 + $0x38] sm:$0xf]
    %v1039 = vld [vmem:[#allocation12 + $0x3c] sm:$0xf]
    %v1040 = vld [vmem:[%s6] sm:$0x1]
    %v1042 = vlaneseq
    %v1043 = vshrl.u32 %v1042, 7
    %v1044 = vsub.s32 0, %v1043
    %v1045 = vrot.slane %v1040, %v1044
    %v1063 = vunpack.c.l.b16 %v1024
    %v1064 = vunpack.c.l.b16 %v1025
    %v1065 = vunpack.c.l.b16 %v1026
    %v1066 = vunpack.c.l.b16 %v1027
    %v1067 = vunpack.c.l.b16 %v1028
    %v1068 = vunpack.c.l.b16 %v1029
    %v1069 = vunpack.c.l.b16 %v1030
    %v1070 = vunpack.c.l.b16 %v1031
    %v1071 = vunpack.c.l.b16 %v1032
    %v1072 = vunpack.c.l.b16 %v1033
    %v1073 = vunpack.c.l.b16 %v1034
    %v1074 = vunpack.c.l.b16 %v1035
    %v1075 = vunpack.c.l.b16 %v1036
    %v1076 = vunpack.c.l.b16 %v1037
    %v1077 = vunpack.c.l.b16 %v1038
    %v1078 = vunpack.c.l.b16 %v1039
    %v1079 = vpack.c.b16 %v1064, %v1063
    %v1080 = vpack.c.b16 %v1066, %v1065
    %v1081 = vpack.c.b16 %v1068, %v1067
    %v1082 = vpack.c.b16 %v1070, %v1069
    %v1083 = vpack.c.b16 %v1072, %v1071
    %v1084 = vpack.c.b16 %v1074, %v1073
    %v1085 = vpack.c.b16 %v1076, %v1075
    %v1086 = vpack.c.b16 %v1078, %v1077
    %1095 = vmatprep.subr.bf16.mxu0 0
    %1096 = vmatpush1.bf16.msra.mxu0 %v1086
    %1097 = vmatprep.subr.bf16.mxu0 0
    %1098 = vmatpush1.bf16.msra.mxu0 %v1085
    %1099 = vmatprep.subr.bf16.mxu0 0
    %1100 = vmatpush1.bf16.msra.mxu0 %v1084
    %1101 = vmatprep.subr.bf16.mxu0 0
    %1102 = vmatpush1.bf16.msra.mxu0 %v1083
    %1103 = vmatprep.subr.bf16.mxu0 0
    %1104 = vmatpush1.bf16.msra.mxu0 %v1082
    %1105 = vmatprep.subr.bf16.mxu0 0
    %1106 = vmatpush1.bf16.msra.mxu0 %v1081
    %1107 = vmatprep.subr.bf16.mxu0 0
    %1108 = vmatpush1.bf16.msra.mxu0 %v1080
    %1109 = vmatprep.subr.bf16.mxu0 0
    %1110 = vmatpush1.bf16.msra.mxu0 %v1079
    %1111 = vmatprep.subr.bf16.mxu0 0
    %1112 = vmatpush2.bf16.msra.mxu0 0
    %1113 = vmatprep.subr.bf16.mxu0 0
    %1114 = vmatpush2.bf16.msra.mxu0 0
    %1115 = vmatprep.subr.bf16.mxu0 0
    %1116 = vmatpush2.bf16.msra.mxu0 0
    %1117 = vmatprep.subr.bf16.mxu0 0
    %1118 = vmatpush2.bf16.msra.mxu0 0
    %1119 = vmatprep.subr.bf16.mxu0 0
    %1120 = vmatpush2.bf16.msra.mxu0 0
    %1121 = vmatprep.subr.bf16.mxu0 0
    %1122 = vmatpush2.bf16.msra.mxu0 0
    %1123 = vmatprep.subr.bf16.mxu0 0
    %1124 = vmatpush2.bf16.msra.mxu0 0
    %1125 = vmatprep.subr.bf16.mxu0 0
    %1126 = vmatpush2.bf16.msra.mxu0 0
    %1127 = vmatprep.mubr.bf16.mxu0 0
    %1128 = vmatmul.mubr.bf16.gmra.mxu0 %v1020
    %v1129 = vpop.f32.mrf.mxu0
    %v1130 = vadd.f32 %v1045, %v1129
    %v1131 = vpop.f32.mrf.mxu0
    %v1132 = vpop.f32.mrf.mxu0
    %v1133 = vadd.f32 %v1045, %v1132
    %v1134 = vpop.f32.mrf.mxu0
    %1135 = vmatprep.mubr.bf16.mxu0 0
    %1136 = vmatmul.mubr.bf16.gmra.mxu0 %v1021
    %v1137 = vpop.f32.mrf.mxu0
    %v1138 = vadd.f32 %v1045, %v1137
    %v1139 = vpop.f32.mrf.mxu0
    %v1140 = vpop.f32.mrf.mxu0
    %v1141 = vadd.f32 %v1045, %v1140
    %v1142 = vpop.f32.mrf.mxu0
    %1143 = vmatprep.mubr.bf16.mxu0 0
    %1144 = vmatmul.mubr.bf16.gmra.mxu0 %v1022
    %v1145 = vpop.f32.mrf.mxu0
    %v1146 = vadd.f32 %v1045, %v1145
    %v1147 = vpop.f32.mrf.mxu0
    %v1148 = vpop.f32.mrf.mxu0
    %v1149 = vadd.f32 %v1045, %v1148
    %v1150 = vpop.f32.mrf.mxu0
    %1151 = vmatprep.mubr.bf16.mxu0 0
    %1152 = vmatmul.mubr.bf16.gmra.mxu0 %v1023
    %v1153 = vpop.f32.mrf.mxu0
    %v1154 = vadd.f32 %v1045, %v1153
    %v1155 = vpop.f32.mrf.mxu0
    %v1156 = vpop.f32.mrf.mxu0
    %v1157 = vadd.f32 %v1045, %v1156
    %v1158 = vpop.f32.mrf.mxu0
    %1159 = vdwg.mxu0
    %1160 = vmax.xlane.f32.xlu0 %v1130
    %v1161 = vpop.xlane.xlu0 %1160
    %1162 = vmax.xlane.f32.xlu0 %v1133
    %v1163 = vpop.xlane.xlu0 %1162
    %1164 = vmax.xlane.f32.xlu0 %v1138
    %v1165 = vpop.xlane.xlu0 %1164
    %1166 = vmax.xlane.f32.xlu0 %v1141
    %v1167 = vpop.xlane.xlu0 %1166
    %1168 = vmax.xlane.f32.xlu0 %v1146
    %v1169 = vpop.xlane.xlu0 %1168
    %1170 = vmax.xlane.f32.xlu0 %v1149
    %v1171 = vpop.xlane.xlu0 %1170
    %1172 = vmax.xlane.f32.xlu0 %v1154
    %v1173 = vpop.xlane.xlu0 %1172
    %1174 = vmax.xlane.f32.xlu0 %v1157
    %v1175 = vpop.xlane.xlu0 %1174
    %v1176 = vsub.f32 %v1130, %v1161
    %v1177 = vsub.f32 %v1133, %v1163
    %v1178 = vsub.f32 %v1138, %v1165
    %v1179 = vsub.f32 %v1141, %v1167
    %v1180 = vsub.f32 %v1146, %v1169
    %v1181 = vsub.f32 %v1149, %v1171
    %v1182 = vsub.f32 %v1154, %v1173
    %v1183 = vsub.f32 %v1157, %v1175
    %v1184 = vmul.f32 %v1176, 1.442695
    %v1185 = vpow.pop %v1184
    %v1186 = vmul.f32 %v1177, 1.442695
    %v1187 = vpow.pop %v1186
    %v1188 = vmul.f32 %v1178, 1.442695
    %v1189 = vpow.pop %v1188
    %v1190 = vmul.f32 %v1179, 1.442695
    %v1191 = vpow.pop %v1190
    %v1192 = vmul.f32 %v1180, 1.442695
    %v1193 = vpow.pop %v1192
    %v1194 = vmul.f32 %v1181, 1.442695
    %v1195 = vpow.pop %v1194
    %v1196 = vmul.f32 %v1182, 1.442695
    %v1197 = vpow.pop %v1196
    %v1198 = vmul.f32 %v1183, 1.442695
    %v1199 = vpow.pop %v1198
    %1200 = vadd.xlane.f32.xlu0 %v1185
    %v1201 = vpop.xlane.xlu0 %1200
    %1202 = vadd.xlane.f32.xlu0 %v1187
    %v1203 = vpop.xlane.xlu0 %1202
    %1204 = vadd.xlane.f32.xlu0 %v1189
    %v1205 = vpop.xlane.xlu0 %1204
    %1206 = vadd.xlane.f32.xlu0 %v1191
    %v1207 = vpop.xlane.xlu0 %1206
    %1208 = vadd.xlane.f32.xlu0 %v1193
    %v1209 = vpop.xlane.xlu0 %1208
    %1210 = vadd.xlane.f32.xlu0 %v1195
    %v1211 = vpop.xlane.xlu0 %1210
    %1212 = vadd.xlane.f32.xlu0 %v1197
    %v1213 = vpop.xlane.xlu0 %1212
    %1214 = vadd.xlane.f32.xlu0 %v1199
    %v1215 = vpop.xlane.xlu0 %1214
    %v1216 = vlog2.pop %v1201
    %v1217 = vmul.f32 %v1216, 0.6931472
    %v1218 = vlog2.pop %v1203
    %v1219 = vmul.f32 %v1218, 0.6931472
    %v1220 = vlog2.pop %v1205
    %v1221 = vmul.f32 %v1220, 0.6931472
    %v1222 = vlog2.pop %v1207
    %v1223 = vmul.f32 %v1222, 0.6931472
    %v1224 = vlog2.pop %v1209
    %v1225 = vmul.f32 %v1224, 0.6931472
    %v1226 = vlog2.pop %v1211
    %v1227 = vmul.f32 %v1226, 0.6931472
    %v1228 = vlog2.pop %v1213
    %v1229 = vmul.f32 %v1228, 0.6931472
    %v1230 = vlog2.pop %v1215
    %v1231 = vmul.f32 %v1230, 0.6931472
    %v1232 = vadd.f32 %v1217, %v1161
    %v1233 = vadd.f32 %v1219, %v1163
    %v1234 = vadd.f32 %v1221, %v1165
    %v1235 = vadd.f32 %v1223, %v1167
    %v1236 = vadd.f32 %v1225, %v1169
    %v1237 = vadd.f32 %v1227, %v1171
    %v1238 = vadd.f32 %v1229, %v1173
    %v1239 = vadd.f32 %v1231, %v1175
    %v1240 = vsub.f32 %v1130, %v1232
    %v1241 = vsub.f32 %v1133, %v1233
    %v1242 = vsub.f32 %v1138, %v1234
    %v1243 = vsub.f32 %v1141, %v1235
    %v1244 = vsub.f32 %v1146, %v1236
    %v1245 = vsub.f32 %v1149, %v1237
    %v1246 = vsub.f32 %v1154, %v1238
    %v1247 = vsub.f32 %v1157, %v1239
    %1248 = vst [vmem:[#allocation13] sm:$0xff] %v1240
    %1249 = vst [vmem:[#allocation13 + $0x8] sm:$0xff] %v1241
    %1250 = vst [vmem:[#allocation13 + $0x10] sm:$0xff] %v1242
    %1251 = vst [vmem:[#allocation13 + $0x18] sm:$0xff] %v1243
    %1252 = vst [vmem:[#allocation13 + $0x20] sm:$0xff] %v1244
    %1253 = vst [vmem:[#allocation13 + $0x28] sm:$0xff] %v1245
    %1254 = vst [vmem:[#allocation13 + $0x30] sm:$0xff] %v1246
    %1255 = vst [vmem:[#allocation13 + $0x38] sm:$0xff] %v1247
    // Predicated region
    $region58: #{tpu_custom_call.1} parent=1 // pred_check
      _
    $region59: #{tpu_custom_call.1} parent=1 // pred_check_branch
      %1257 = sbr.rel (0) target = $region61
    $region60: #{tpu_custom_call.1} parent=1 // pred_region
      %s1259 = ssub.s32 1024, 1024
      %1260 = vsyncadd [#allocation6], %s1259
      %s1261 = sshll.u32 [#allocation13], 4
      %s1262 = int_to_ptr.vmem [resolvable:$true] %s1261
      %1267 = dma.vmem_to_hbm [thread:$0]  %s1262, 1024, %s7, [#allocation6], 128, 128, 8
    $region61: #{tpu_custom_call.1} parent=1 // pred_fallthru
      _
    // Predicated region
    $region62: #{tpu_custom_call.1} parent=1 // pred_check
      _
    $region63: #{tpu_custom_call.1} parent=1 // pred_check_branch
      %1269 = sbr.rel (0) target = $region65
    $region64: #{tpu_custom_call.1} parent=1 // pred_region
      %s1271 = ssub.s32 128, 128
      %1272 = vsyncadd [#allocation15], %s1271
      %s1274 = sshll.u32 [#allocation14], 4
      %s1275 = int_to_ptr.vmem [resolvable:$true] %s1274
      %1277 = dma.vmem_to_hbm [thread:$0]  %s1275, 128, %s8, [#allocation15]
    $region65: #{tpu_custom_call.1} parent=1 // pred_fallthru
      _
    // Predicated region
    $region66: #{tpu_custom_call.1} parent=1 // pred_check
      _
    $region67: #{tpu_custom_call.1} parent=1 // pred_check_branch
      %1279 = sbr.rel (0) target = $region69
    $region68: #{tpu_custom_call.1} parent=1 // pred_region
      %1280 = dma.done [#allocation6], 1024
    $region69: #{tpu_custom_call.1} parent=1 // pred_fallthru
      _
    // Predicated region
    $region70: #{tpu_custom_call.1} parent=1 // pred_check
      _
    $region71: #{tpu_custom_call.1} parent=1 // pred_check_branch
      %1282 = sbr.rel (0) target = $region73
    $region72: #{tpu_custom_call.1} parent=1 // pred_region
      %1283 = dma.done [#allocation15], 128
    $region73: #{tpu_custom_call.1} parent=1 // pred_fallthru
      _
    %1284 = vsyncpa [#allocation5], 1
    %1285 = vsyncpa [#allocation8], 1
    %1286 = vsyncpa [#allocation11], 1
    %1287 = vsyncpa [#allocation6], 1
    %1288 = vsyncpa [#allocation15], 1

</llo_original>
